<compile_context>
chip_gen: v6e
topology: v6e:2x2x1
jax: 0.10.0
libtpu: 0.0.40
codegen_flags: <defaults>
</compile_context>

<pallas_src>
import jax
import jax.numpy as jnp
from jax.experimental import pallas as pl
from jax.experimental.pallas import tpu as pltpu

# ----- problem sizes (small, consistent with the module) -----
B = 2                     # batch per view
C_IN = 4                  # input channels
H = W = 16                # spatial
K = 3                     # conv kernel
NUM_FTRS = 32             # encoder feature dim
OUT_DIM = 64              # projector output dim
HW = H * W
N_IMG = 2 * B             # both views fused into one row slab
KKC = K * K * C_IN        # 36 : im2col contraction depth
KKC_PAD = 128             # lane-dense padded contraction depth
PACK = 128                # packed output width: [ h (32) | z (64) | zero pad (32) ]
Z_PAD = PACK - NUM_FTRS   # 96 : projector-2 output padded to fill the packed block


# --------------------------- fused Pallas kernel -----------------------------

def simclr_fused_kernel(p_ref, wc_ref, bc_ref, w1_ref, b1_ref, w2_ref, hz_ref):
    """Fused encoder + projector for BOTH views in one step.

    p_ref : (N_IMG*HW, 128) f32  lane-dense im2col patches (cols >= 36 are zero)
    wc_ref: (128, F)        f32  conv weight in im2col layout (rows >= 36 are zero)
    bc_ref: (1, F)          f32  conv bias
    w1_ref: (F, F)          f32  projector layer-1 weight (in, out)
    b1_ref: (1, F)          f32  projector layer-1 bias
    w2_ref: (F, 96)         f32  projector layer-2 weight (cols >= 64 are zero)
    hz_ref: (N_IMG, 128)    f32  packed output: [:, :F]=h, [:, F:F+64]=z
    """
    wc = wc_ref[...]
    bc = bc_ref[...]
    inv_hw = 1.0 / HW

    # ---- conv (single im2col dot per image) + bias + ReLU + global avg pool ----
    pooled_rows = []
    for img in range(N_IMG):                            # 4 static, tile-aligned chunks
        patch = p_ref[img * HW:(img + 1) * HW, :]       # (HW, 128), static slice
        conv = jnp.dot(patch, wc, preferred_element_type=jnp.float32)   # (HW, F)
        act = jnp.maximum(conv + bc, 0.0)
        pooled_rows.append(jnp.sum(act, axis=0, keepdims=True) * inv_hw)  # (1, F)
    h = jnp.concatenate(pooled_rows, axis=0)            # (N_IMG, F) encoder output

    # ---- projector: Linear + bias -> ReLU -> Linear (no bias, padded to 96) ----
    hid = jnp.dot(h, w1_ref[...], preferred_element_type=jnp.float32)
    hid = jnp.maximum(hid + b1_ref[...], 0.0)
    z = jnp.dot(hid, w2_ref[...], preferred_element_type=jnp.float32)   # (N_IMG, 96)

    # ---- single unmasked 128-lane-wide store of the packed result ----
    hz_ref[...] = jnp.concatenate([h, z], axis=-1)      # (N_IMG, 128)


# --------------------------- wrapper ------------------------------------------

def _im2col(x):
    """x: (N, C, H, W) f32 -> lane-dense im2col patches (N*H*W, 128) f32."""
    xp = jnp.transpose(x, (0, 2, 3, 1))                              # NHWC
    xp = jnp.pad(xp, ((0, 0), (1, 1), (1, 1), (0, 0)))               # SAME pad
    cols = [xp[:, kh:kh + H, kw:kw + W, :] for kh in range(K) for kw in range(K)]
    patches = jnp.concatenate(cols, axis=-1)                         # (N, H, W, K*K*C)
    patches = patches.reshape(x.shape[0] * HW, KKC)
    return jnp.pad(patches, ((0, 0), (0, KKC_PAD - KKC)))            # lane-dense 128


@jax.jit
def simclr_forward(x_i, x_j, params):
    """Mirrors SimCLR.forward: returns (h_i, h_j, z_i, z_j)."""
    # Host glue: fuse both views along the batch axis, build lane-dense patches.
    x = jnp.concatenate([x_i, x_j], axis=0)              # rows [0,B)=view i, [B,2B)=view j
    patches = _im2col(x).astype(jnp.float32)              # (2B*HW, 128)

    vmem = pl.BlockSpec(memory_space=pltpu.MemorySpace.VMEM)   # whole array, VMEM-resident
    hz = pl.pallas_call(
        simclr_fused_kernel,
        out_shape=jax.ShapeDtypeStruct((N_IMG, PACK), jnp.float32),
        in_specs=[vmem] * 6,
        out_specs=vmem,
    )(patches, params["conv_w"], params["conv_b"],
      params["w1"], params["b1"], params["w2"])

    h_i = hz[:B, :NUM_FTRS]
    h_j = hz[B:, :NUM_FTRS]
    z_i = hz[:B, NUM_FTRS:NUM_FTRS + OUT_DIM]
    z_j = hz[B:, NUM_FTRS:NUM_FTRS + OUT_DIM]
    return h_i, h_j, z_i, z_j


def init_params(key):
    k1, k2, k3, k4, k5 = jax.random.split(key, 5)
    s = 0.05
    # Conv weight stored directly in fused im2col layout (K*K*C_IN, F), zero-padded
    # to (128, F) so the lane-padded patch columns contribute nothing.
    # TODO(synk): a real PyTorch Conv2d weight (F, C, kh, kw) must be permuted to
    # (kh, kw, C, F) and reshaped to (K*K*C, F); Linear weights (out, in) must be
    # transposed to (in, out); w2 additionally zero-padded from 64 to 96 columns.
    conv_w = s * jax.random.normal(k1, (KKC, NUM_FTRS), jnp.float32)
    conv_w = jnp.pad(conv_w, ((0, KKC_PAD - KKC), (0, 0)))
    w2 = s * jax.random.normal(k5, (NUM_FTRS, OUT_DIM), jnp.float32)
    w2 = jnp.pad(w2, ((0, 0), (0, Z_PAD - OUT_DIM)))
    return {
        "conv_w": conv_w,                                               # (128, 32)
        "conv_b": s * jax.random.normal(k2, (1, NUM_FTRS), jnp.float32),
        "w1": s * jax.random.normal(k3, (NUM_FTRS, NUM_FTRS), jnp.float32),
        "b1": s * jax.random.normal(k4, (1, NUM_FTRS), jnp.float32),
        "w2": w2,                                                       # (32, 96)
    }


if __name__ == "__main__":
    key = jax.random.PRNGKey(0)
    kx, ky, kp = jax.random.split(key, 3)
    x_i = jax.random.normal(kx, (B, C_IN, H, W), jnp.float32)
    x_j = jax.random.normal(ky, (B, C_IN, H, W), jnp.float32)
    params = init_params(kp)

    h_i, h_j, z_i, z_j = simclr_forward(x_i, x_j, params)
    jax.block_until_ready((h_i, h_j, z_i, z_j))

    assert h_i.shape == (B, NUM_FTRS) and h_j.shape == (B, NUM_FTRS)
    assert z_i.shape == (B, OUT_DIM) and z_j.shape == (B, OUT_DIM)
    print("KERNEL_OK")
</pallas_src>

<mosaic_0001>
module attributes {stable_mosaic.version = 11 : i64} {
  func.func @simclr_fused_kernel(%arg0: memref<1024x128xf32, #tpu.memory_space<vmem>>, %arg1: memref<128x32xf32, #tpu.memory_space<vmem>>, %arg2: memref<1x32xf32, #tpu.memory_space<vmem>>, %arg3: memref<32x32xf32, #tpu.memory_space<vmem>>, %arg4: memref<1x32xf32, #tpu.memory_space<vmem>>, %arg5: memref<32x96xf32, #tpu.memory_space<vmem>>, %arg6: memref<4x128xf32, #tpu.memory_space<vmem>>) attributes {dimension_semantics = [], scalar_prefetch = 0 : i64, scratch_operands = 0 : i64, tpu.core_type = #tpu.core_type<tc>} {
    %c0 = arith.constant 0 : index
    %c0_0 = arith.constant 0 : index
    %0 = vector.load %arg1[%c0, %c0_0] : memref<128x32xf32, #tpu.memory_space<vmem>>, vector<128x32xf32>
    %c0_1 = arith.constant 0 : index
    %c0_2 = arith.constant 0 : index
    %1 = vector.load %arg2[%c0_1, %c0_2] : memref<1x32xf32, #tpu.memory_space<vmem>>, vector<1x32xf32>
    %c0_3 = arith.constant 0 : index
    %c0_4 = arith.constant 0 : index
    %2 = vector.load %arg0[%c0_3, %c0_4] : memref<1024x128xf32, #tpu.memory_space<vmem>>, vector<256x128xf32>
    %cst = arith.constant dense<0.000000e+00> : vector<256x32xf32>
    %3 = tpu.matmul %2, %0, %cst {dimension_numbers = #tpu.dot_dimension_numbers<[1], [0], [0], [1], [0, 0, 1, 1], [], []>} : vector<256x128xf32>, vector<128x32xf32>, vector<256x32xf32> -> vector<256x32xf32>
    %4 = vector.broadcast %1 : vector<1x32xf32> to vector<256x32xf32>
    %5 = arith.addf %3, %4 : vector<256x32xf32>
    %cst_5 = arith.constant 0.000000e+00 : f32
    %6 = vector.broadcast %cst_5 : f32 to vector<256x32xf32>
    %7 = arith.maximumf %5, %6 : vector<256x32xf32>
    %cst_6 = arith.constant dense<0.000000e+00> : vector<32xf32>
    %8 = vector.multi_reduction <add>, %7, %cst_6 [0] : vector<256x32xf32> to vector<32xf32>
    %9 = vector.shape_cast %8 : vector<32xf32> to vector<1x32xf32>
    %cst_7 = arith.constant 3.906250e-03 : f32
    %10 = vector.broadcast %cst_7 : f32 to vector<1x32xf32>
    %11 = arith.mulf %9, %10 : vector<1x32xf32>
    %c256 = arith.constant 256 : index
    %c0_8 = arith.constant 0 : index
    %12 = vector.load %arg0[%c256, %c0_8] : memref<1024x128xf32, #tpu.memory_space<vmem>>, vector<256x128xf32>
    %cst_9 = arith.constant dense<0.000000e+00> : vector<256x32xf32>
    %13 = tpu.matmul %12, %0, %cst_9 {dimension_numbers = #tpu.dot_dimension_numbers<[1], [0], [0], [1], [0, 0, 1, 1], [], []>} : vector<256x128xf32>, vector<128x32xf32>, vector<256x32xf32> -> vector<256x32xf32>
    %14 = vector.broadcast %1 : vector<1x32xf32> to vector<256x32xf32>
    %15 = arith.addf %13, %14 : vector<256x32xf32>
    %cst_10 = arith.constant 0.000000e+00 : f32
    %16 = vector.broadcast %cst_10 : f32 to vector<256x32xf32>
    %17 = arith.maximumf %15, %16 : vector<256x32xf32>
    %cst_11 = arith.constant dense<0.000000e+00> : vector<32xf32>
    %18 = vector.multi_reduction <add>, %17, %cst_11 [0] : vector<256x32xf32> to vector<32xf32>
    %19 = vector.shape_cast %18 : vector<32xf32> to vector<1x32xf32>
    %cst_12 = arith.constant 3.906250e-03 : f32
    %20 = vector.broadcast %cst_12 : f32 to vector<1x32xf32>
    %21 = arith.mulf %19, %20 : vector<1x32xf32>
    %c512 = arith.constant 512 : index
    %c0_13 = arith.constant 0 : index
    %22 = vector.load %arg0[%c512, %c0_13] : memref<1024x128xf32, #tpu.memory_space<vmem>>, vector<256x128xf32>
    %cst_14 = arith.constant dense<0.000000e+00> : vector<256x32xf32>
    %23 = tpu.matmul %22, %0, %cst_14 {dimension_numbers = #tpu.dot_dimension_numbers<[1], [0], [0], [1], [0, 0, 1, 1], [], []>} : vector<256x128xf32>, vector<128x32xf32>, vector<256x32xf32> -> vector<256x32xf32>
    %24 = vector.broadcast %1 : vector<1x32xf32> to vector<256x32xf32>
    %25 = arith.addf %23, %24 : vector<256x32xf32>
    %cst_15 = arith.constant 0.000000e+00 : f32
    %26 = vector.broadcast %cst_15 : f32 to vector<256x32xf32>
    %27 = arith.maximumf %25, %26 : vector<256x32xf32>
    %cst_16 = arith.constant dense<0.000000e+00> : vector<32xf32>
    %28 = vector.multi_reduction <add>, %27, %cst_16 [0] : vector<256x32xf32> to vector<32xf32>
    %29 = vector.shape_cast %28 : vector<32xf32> to vector<1x32xf32>
    %cst_17 = arith.constant 3.906250e-03 : f32
    %30 = vector.broadcast %cst_17 : f32 to vector<1x32xf32>
    %31 = arith.mulf %29, %30 : vector<1x32xf32>
    %c768 = arith.constant 768 : index
    %c0_18 = arith.constant 0 : index
    %32 = vector.load %arg0[%c768, %c0_18] : memref<1024x128xf32, #tpu.memory_space<vmem>>, vector<256x128xf32>
    %cst_19 = arith.constant dense<0.000000e+00> : vector<256x32xf32>
    %33 = tpu.matmul %32, %0, %cst_19 {dimension_numbers = #tpu.dot_dimension_numbers<[1], [0], [0], [1], [0, 0, 1, 1], [], []>} : vector<256x128xf32>, vector<128x32xf32>, vector<256x32xf32> -> vector<256x32xf32>
    %34 = vector.broadcast %1 : vector<1x32xf32> to vector<256x32xf32>
    %35 = arith.addf %33, %34 : vector<256x32xf32>
    %cst_20 = arith.constant 0.000000e+00 : f32
    %36 = vector.broadcast %cst_20 : f32 to vector<256x32xf32>
    %37 = arith.maximumf %35, %36 : vector<256x32xf32>
    %cst_21 = arith.constant dense<0.000000e+00> : vector<32xf32>
    %38 = vector.multi_reduction <add>, %37, %cst_21 [0] : vector<256x32xf32> to vector<32xf32>
    %39 = vector.shape_cast %38 : vector<32xf32> to vector<1x32xf32>
    %cst_22 = arith.constant 3.906250e-03 : f32
    %40 = vector.broadcast %cst_22 : f32 to vector<1x32xf32>
    %41 = arith.mulf %39, %40 : vector<1x32xf32>
    %42 = tpu.concatenate %11, %21, %31, %41 in 0 : vector<1x32xf32>, vector<1x32xf32>, vector<1x32xf32>, vector<1x32xf32> -> vector<4x32xf32>
    %c0_23 = arith.constant 0 : index
    %c0_24 = arith.constant 0 : index
    %43 = vector.load %arg3[%c0_23, %c0_24] : memref<32x32xf32, #tpu.memory_space<vmem>>, vector<32x32xf32>
    %cst_25 = arith.constant dense<0.000000e+00> : vector<4x32xf32>
    %44 = tpu.matmul %42, %43, %cst_25 {dimension_numbers = #tpu.dot_dimension_numbers<[1], [0], [0], [1], [0, 0, 1, 1], [], []>} : vector<4x32xf32>, vector<32x32xf32>, vector<4x32xf32> -> vector<4x32xf32>
    %c0_26 = arith.constant 0 : index
    %c0_27 = arith.constant 0 : index
    %45 = vector.load %arg4[%c0_26, %c0_27] : memref<1x32xf32, #tpu.memory_space<vmem>>, vector<1x32xf32>
    %46 = vector.broadcast %45 : vector<1x32xf32> to vector<4x32xf32>
    %47 = arith.addf %44, %46 : vector<4x32xf32>
    %cst_28 = arith.constant 0.000000e+00 : f32
    %48 = vector.broadcast %cst_28 : f32 to vector<4x32xf32>
    %49 = arith.maximumf %47, %48 : vector<4x32xf32>
    %c0_29 = arith.constant 0 : index
    %c0_30 = arith.constant 0 : index
    %50 = vector.load %arg5[%c0_29, %c0_30] : memref<32x96xf32, #tpu.memory_space<vmem>>, vector<32x96xf32>
    %cst_31 = arith.constant dense<0.000000e+00> : vector<4x96xf32>
    %51 = tpu.matmul %49, %50, %cst_31 {dimension_numbers = #tpu.dot_dimension_numbers<[1], [0], [0], [1], [0, 0, 1, 1], [], []>} : vector<4x32xf32>, vector<32x96xf32>, vector<4x96xf32> -> vector<4x96xf32>
    %52 = tpu.concatenate %42, %51 in 1 : vector<4x32xf32>, vector<4x96xf32> -> vector<4x128xf32>
    %c0_32 = arith.constant 0 : index
    %c0_33 = arith.constant 0 : index
    %53 = vector.load %arg6[%c0_32, %c0_33] : memref<4x128xf32, #tpu.memory_space<vmem>>, vector<4x128xf32>
    tpu.vector_store %arg6[%c0_32, %c0_33], %52 {strides = array<i32>} : memref<4x128xf32, #tpu.memory_space<vmem>>, vector<4x128xf32>,
    return
  }
}

</mosaic_0001>

<llo_original>
// kernel: simclr_forward.1
$region0: #{simclr_forward.1}
  #allocation0 [shape = 'u32[]', space=smem, size = 0x4, offset = 0x4, fixed_abs, tag = 'smem constant byte address 0x4 - core index']
  #allocation1 [shape = 'u32[144,128]{1,0:T(1,128)}', space=vmem, size = 0x12000, scoped, tag = 'internal scratch']
  %s0 = inlined_call_operand.vmem [shape: f32[1024,128], index: 0, kind: input, shape index: {}]
  %s1 = inlined_call_operand.vmem [shape: f32[128,32], index: 1, kind: input, shape index: {}]
  %s2 = inlined_call_operand.vmem [shape: f32[1,32], index: 2, kind: input, shape index: {}]
  %s3 = inlined_call_operand.vmem [shape: f32[32,32], index: 3, kind: input, shape index: {}]
  %s4 = inlined_call_operand.vmem [shape: f32[1,32], index: 4, kind: input, shape index: {}]
  %s5 = inlined_call_operand.vmem [shape: f32[32,96], index: 5, kind: input, shape index: {}]
  %s6 = inlined_call_operand.vmem [shape: f32[4,128], index: 6, kind: output, shape index: {}]
  %s7 = sld [smem:[#allocation0]]
  $region34: #{simclr_forward.1} parent=0
    _
  %s9 = ssub.s32 1, %s7
  %s10 = scalar_select 0, %s9, %s7
  // Predicated region
  $region2: #{simclr_forward.1} parent=0 // pred_check
    _
  $region3: #{simclr_forward.1} parent=0 // pred_check_branch
    %12 = sbr.rel (0) target = $region5
  $region4: #{simclr_forward.1} parent=0 // pred_region
    _
  $region5: #{simclr_forward.1} parent=0 // pred_fallthru
    _
  // Predicated region
  $region6: #{simclr_forward.1} parent=0 // pred_check
    _
  $region7: #{simclr_forward.1} parent=0 // pred_check_branch
    %14 = sbr.rel (0) target = $region9
  $region8: #{simclr_forward.1} parent=0 // pred_region
    _
  $region9: #{simclr_forward.1} parent=0 // pred_fallthru
    _
  // Predicated region
  $region10: #{simclr_forward.1} parent=0 // pred_check
    _
  $region11: #{simclr_forward.1} parent=0 // pred_check_branch
    %16 = sbr.rel (0) target = $region13
  $region12: #{simclr_forward.1} parent=0 // pred_region
    _
  $region13: #{simclr_forward.1} parent=0 // pred_fallthru
    _
  // Predicated region
  $region14: #{simclr_forward.1} parent=0 // pred_check
    _
  $region15: #{simclr_forward.1} parent=0 // pred_check_branch
    %18 = sbr.rel (0) target = $region17
  $region16: #{simclr_forward.1} parent=0 // pred_region
    _
  $region17: #{simclr_forward.1} parent=0 // pred_fallthru
    _
  // Predicated region
  $region18: #{simclr_forward.1} parent=0 // pred_check
    _
  $region19: #{simclr_forward.1} parent=0 // pred_check_branch
    %20 = sbr.rel (0) target = $region21
  $region20: #{simclr_forward.1} parent=0 // pred_region
    _
  $region21: #{simclr_forward.1} parent=0 // pred_fallthru
    _
  // Predicated region
  $region22: #{simclr_forward.1} parent=0 // pred_check
    _
  $region23: #{simclr_forward.1} parent=0 // pred_check_branch
    %22 = sbr.rel (0) target = $region25
  $region24: #{simclr_forward.1} parent=0 // pred_region
    _
  $region25: #{simclr_forward.1} parent=0 // pred_fallthru
    _
  %v23 = vld [vmem:[%s1] sm:$0xff]
  %v24 = vld [vmem:[%s1 + $0x8] sm:$0xff]
  %v25 = vld [vmem:[%s1 + $0x10] sm:$0xff]
  %v26 = vld [vmem:[%s1 + $0x18] sm:$0xff]
  %v27 = vld [vmem:[%s1 + $0x20] sm:$0xff]
  %v28 = vld [vmem:[%s1 + $0x28] sm:$0xff]
  %v29 = vld [vmem:[%s1 + $0x30] sm:$0xff]
  %v30 = vld [vmem:[%s1 + $0x38] sm:$0xff]
  %v31 = vld [vmem:[%s1 + $0x40] sm:$0xff]
  %v32 = vld [vmem:[%s1 + $0x48] sm:$0xff]
  %v33 = vld [vmem:[%s1 + $0x50] sm:$0xff]
  %v34 = vld [vmem:[%s1 + $0x58] sm:$0xff]
  %v35 = vld [vmem:[%s1 + $0x60] sm:$0xff]
  %v36 = vld [vmem:[%s1 + $0x68] sm:$0xff]
  %v37 = vld [vmem:[%s1 + $0x70] sm:$0xff]
  %v38 = vld [vmem:[%s1 + $0x78] sm:$0xff]
  %v39 = vld [vmem:[%s2] sm:$0x1]
  %v40 = vld [vmem:[%s0] sm:$0xff]
  %v41 = vld [vmem:[%s0 + $0x8] sm:$0xff]
  %v42 = vld [vmem:[%s0 + $0x10] sm:$0xff]
  %v43 = vld [vmem:[%s0 + $0x18] sm:$0xff]
  %v44 = vld [vmem:[%s0 + $0x20] sm:$0xff]
  %v45 = vld [vmem:[%s0 + $0x28] sm:$0xff]
  %v46 = vld [vmem:[%s0 + $0x30] sm:$0xff]
  %v47 = vld [vmem:[%s0 + $0x38] sm:$0xff]
  %v48 = vld [vmem:[%s0 + $0x40] sm:$0xff]
  %v49 = vld [vmem:[%s0 + $0x48] sm:$0xff]
  %v50 = vld [vmem:[%s0 + $0x50] sm:$0xff]
  %v51 = vld [vmem:[%s0 + $0x58] sm:$0xff]
  %v52 = vld [vmem:[%s0 + $0x60] sm:$0xff]
  %v53 = vld [vmem:[%s0 + $0x68] sm:$0xff]
  %v54 = vld [vmem:[%s0 + $0x70] sm:$0xff]
  %v55 = vld [vmem:[%s0 + $0x78] sm:$0xff]
  %v56 = vld [vmem:[%s0 + $0x80] sm:$0xff]
  %v57 = vld [vmem:[%s0 + $0x88] sm:$0xff]
  %v58 = vld [vmem:[%s0 + $0x90] sm:$0xff]
  %v59 = vld [vmem:[%s0 + $0x98] sm:$0xff]
  %v60 = vld [vmem:[%s0 + $0xa0] sm:$0xff]
  %v61 = vld [vmem:[%s0 + $0xa8] sm:$0xff]
  %v62 = vld [vmem:[%s0 + $0xb0] sm:$0xff]
  %v63 = vld [vmem:[%s0 + $0xb8] sm:$0xff]
  %v64 = vld [vmem:[%s0 + $0xc0] sm:$0xff]
  %v65 = vld [vmem:[%s0 + $0xc8] sm:$0xff]
  %v66 = vld [vmem:[%s0 + $0xd0] sm:$0xff]
  %v67 = vld [vmem:[%s0 + $0xd8] sm:$0xff]
  %v68 = vld [vmem:[%s0 + $0xe0] sm:$0xff]
  %v69 = vld [vmem:[%s0 + $0xe8] sm:$0xff]
  %v70 = vld [vmem:[%s0 + $0xf0] sm:$0xff]
  %v71 = vld [vmem:[%s0 + $0xf8] sm:$0xff]
  %v73 = vlaneseq
  %v74 = vshrl.u32 %v73, 7
  %v75 = vsub.s32 0, %v74
  %v76 = vrot.slane %v39, %v75
  %78 = vmatprep.subr.mxu0 0.0
  %79 = vmatpush1.msra.mxu0 %v38
  %80 = vmatprep.subr.mxu0 0.0
  %81 = vmatpush1.msra.mxu0 %v37
  %82 = vmatprep.subr.mxu0 0.0
  %83 = vmatpush1.msra.mxu0 %v36
  %84 = vmatprep.subr.mxu0 0.0
  %85 = vmatpush1.msra.mxu0 %v35
  %86 = vmatprep.subr.mxu0 0.0
  %87 = vmatpush1.msra.mxu0 %v34
  %88 = vmatprep.subr.mxu0 0.0
  %89 = vmatpush1.msra.mxu0 %v33
  %90 = vmatprep.subr.mxu0 0.0
  %91 = vmatpush1.msra.mxu0 %v32
  %92 = vmatprep.subr.mxu0 0.0
  %93 = vmatpush1.msra.mxu0 %v31
  %94 = vmatprep.subr.mxu0 0.0
  %95 = vmatpush1.msra.mxu0 %v30
  %96 = vmatprep.subr.mxu0 0.0
  %97 = vmatpush1.msra.mxu0 %v29
  %98 = vmatprep.subr.mxu0 0.0
  %99 = vmatpush1.msra.mxu0 %v28
  %100 = vmatprep.subr.mxu0 0.0
  %101 = vmatpush1.msra.mxu0 %v27
  %102 = vmatprep.subr.mxu0 0.0
  %103 = vmatpush1.msra.mxu0 %v26
  %104 = vmatprep.subr.mxu0 0.0
  %105 = vmatpush1.msra.mxu0 %v25
  %106 = vmatprep.subr.mxu0 0.0
  %107 = vmatpush1.msra.mxu0 %v24
  %108 = vmatprep.subr.mxu0 0.0
  %109 = vmatpush1.msra.mxu0 %v23
  %110 = vmatprep.subr.mxu0 0.0
  %111 = vmatpush2.msra.mxu0 0.0
  %112 = vmatprep.subr.mxu0 0.0
  %113 = vmatpush2.msra.mxu0 0.0
  %114 = vmatprep.subr.mxu0 0.0
  %115 = vmatpush2.msra.mxu0 0.0
  %116 = vmatprep.subr.mxu0 0.0
  %117 = vmatpush2.msra.mxu0 0.0
  %118 = vmatprep.subr.mxu0 0.0
  %119 = vmatpush2.msra.mxu0 0.0
  %120 = vmatprep.subr.mxu0 0.0
  %121 = vmatpush2.msra.mxu0 0.0
  %122 = vmatprep.subr.mxu0 0.0
  %123 = vmatpush2.msra.mxu0 0.0
  %124 = vmatprep.subr.mxu0 0.0
  %125 = vmatpush2.msra.mxu0 0.0
  %126 = vmatprep.subr.mxu0 0.0
  %127 = vmatpush2.msra.mxu0 0.0
  %128 = vmatprep.subr.mxu0 0.0
  %129 = vmatpush2.msra.mxu0 0.0
  %130 = vmatprep.subr.mxu0 0.0
  %131 = vmatpush2.msra.mxu0 0.0
  %132 = vmatprep.subr.mxu0 0.0
  %133 = vmatpush2.msra.mxu0 0.0
  %134 = vmatprep.subr.mxu0 0.0
  %135 = vmatpush2.msra.mxu0 0.0
  %136 = vmatprep.subr.mxu0 0.0
  %137 = vmatpush2.msra.mxu0 0.0
  %138 = vmatprep.subr.mxu0 0.0
  %139 = vmatpush2.msra.mxu0 0.0
  %140 = vmatprep.subr.mxu0 0.0
  %141 = vmatpush2.msra.mxu0 0.0
  %142 = vmatprep.mubr.f32.mxu0 0.0
  %143 = vmatmul.mubr.f32.gmra.mxu0 %v40
  %v144 = vpop.f32.mrf.mxu0
  %v145 = vadd.f32 %v76, %v144
  %v146 = vpop.f32.mrf.mxu0
  %147 = vmatprep.mubr.f32.mxu0 0.0
  %148 = vmatmul.mubr.f32.gmra.mxu0 %v41
  %v149 = vpop.f32.mrf.mxu0
  %v150 = vadd.f32 %v76, %v149
  %v151 = vpop.f32.mrf.mxu0
  %152 = vmatprep.mubr.f32.mxu0 0.0
  %153 = vmatmul.mubr.f32.gmra.mxu0 %v42
  %v154 = vpop.f32.mrf.mxu0
  %v155 = vadd.f32 %v76, %v154
  %v156 = vpop.f32.mrf.mxu0
  %157 = vmatprep.mubr.f32.mxu0 0.0
  %158 = vmatmul.mubr.f32.gmra.mxu0 %v43
  %v159 = vpop.f32.mrf.mxu0
  %v160 = vadd.f32 %v76, %v159
  %v161 = vpop.f32.mrf.mxu0
  %162 = vmatprep.mubr.f32.mxu0 0.0
  %163 = vmatmul.mubr.f32.gmra.mxu0 %v44
  %v164 = vpop.f32.mrf.mxu0
  %v165 = vadd.f32 %v76, %v164
  %v166 = vpop.f32.mrf.mxu0
  %167 = vmatprep.mubr.f32.mxu0 0.0
  %168 = vmatmul.mubr.f32.gmra.mxu0 %v45
  %v169 = vpop.f32.mrf.mxu0
  %v170 = vadd.f32 %v76, %v169
  %v171 = vpop.f32.mrf.mxu0
  %172 = vmatprep.mubr.f32.mxu0 0.0
  %173 = vmatmul.mubr.f32.gmra.mxu0 %v46
  %v174 = vpop.f32.mrf.mxu0
  %v175 = vadd.f32 %v76, %v174
  %v176 = vpop.f32.mrf.mxu0
  %177 = vmatprep.mubr.f32.mxu0 0.0
  %178 = vmatmul.mubr.f32.gmra.mxu0 %v47
  %v179 = vpop.f32.mrf.mxu0
  %v180 = vadd.f32 %v76, %v179
  %v181 = vpop.f32.mrf.mxu0
  %182 = vmatprep.mubr.f32.mxu0 0.0
  %183 = vmatmul.mubr.f32.gmra.mxu0 %v48
  %v184 = vpop.f32.mrf.mxu0
  %v185 = vadd.f32 %v76, %v184
  %v186 = vpop.f32.mrf.mxu0
  %187 = vmatprep.mubr.f32.mxu0 0.0
  %188 = vmatmul.mubr.f32.gmra.mxu0 %v49
  %v189 = vpop.f32.mrf.mxu0
  %v190 = vadd.f32 %v76, %v189
  %v191 = vpop.f32.mrf.mxu0
  %192 = vmatprep.mubr.f32.mxu0 0.0
  %193 = vmatmul.mubr.f32.gmra.mxu0 %v50
  %v194 = vpop.f32.mrf.mxu0
  %v195 = vadd.f32 %v76, %v194
  %v196 = vpop.f32.mrf.mxu0
  %197 = vmatprep.mubr.f32.mxu0 0.0
  %198 = vmatmul.mubr.f32.gmra.mxu0 %v51
  %v199 = vpop.f32.mrf.mxu0
  %v200 = vadd.f32 %v76, %v199
  %v201 = vpop.f32.mrf.mxu0
  %202 = vmatprep.mubr.f32.mxu0 0.0
  %203 = vmatmul.mubr.f32.gmra.mxu0 %v52
  %v204 = vpop.f32.mrf.mxu0
  %v205 = vadd.f32 %v76, %v204
  %v206 = vpop.f32.mrf.mxu0
  %207 = vmatprep.mubr.f32.mxu0 0.0
  %208 = vmatmul.mubr.f32.gmra.mxu0 %v53
  %v209 = vpop.f32.mrf.mxu0
  %v210 = vadd.f32 %v76, %v209
  %v211 = vpop.f32.mrf.mxu0
  %212 = vmatprep.mubr.f32.mxu0 0.0
  %213 = vmatmul.mubr.f32.gmra.mxu0 %v54
  %v214 = vpop.f32.mrf.mxu0
  %v215 = vadd.f32 %v76, %v214
  %v216 = vpop.f32.mrf.mxu0
  %217 = vmatprep.mubr.f32.mxu0 0.0
  %218 = vmatmul.mubr.f32.gmra.mxu0 %v55
  %v219 = vpop.f32.mrf.mxu0
  %v220 = vadd.f32 %v76, %v219
  %v221 = vpop.f32.mrf.mxu0
  %222 = vmatprep.mubr.f32.mxu0 0.0
  %223 = vmatmul.mubr.f32.gmra.mxu0 %v56
  %v224 = vpop.f32.mrf.mxu0
  %v225 = vadd.f32 %v76, %v224
  %v226 = vpop.f32.mrf.mxu0
  %227 = vmatprep.mubr.f32.mxu0 0.0
  %228 = vmatmul.mubr.f32.gmra.mxu0 %v57
  %v229 = vpop.f32.mrf.mxu0
  %v230 = vadd.f32 %v76, %v229
  %v231 = vpop.f32.mrf.mxu0
  %232 = vmatprep.mubr.f32.mxu0 0.0
  %233 = vmatmul.mubr.f32.gmra.mxu0 %v58
  %v234 = vpop.f32.mrf.mxu0
  %v235 = vadd.f32 %v76, %v234
  %v236 = vpop.f32.mrf.mxu0
  %237 = vmatprep.mubr.f32.mxu0 0.0
  %238 = vmatmul.mubr.f32.gmra.mxu0 %v59
  %v239 = vpop.f32.mrf.mxu0
  %v240 = vadd.f32 %v76, %v239
  %v241 = vpop.f32.mrf.mxu0
  %242 = vmatprep.mubr.f32.mxu0 0.0
  %243 = vmatmul.mubr.f32.gmra.mxu0 %v60
  %v244 = vpop.f32.mrf.mxu0
  %v245 = vadd.f32 %v76, %v244
  %v246 = vpop.f32.mrf.mxu0
  %247 = vmatprep.mubr.f32.mxu0 0.0
  %248 = vmatmul.mubr.f32.gmra.mxu0 %v61
  %v249 = vpop.f32.mrf.mxu0
  %v250 = vadd.f32 %v76, %v249
  %v251 = vpop.f32.mrf.mxu0
  %252 = vmatprep.mubr.f32.mxu0 0.0
  %253 = vmatmul.mubr.f32.gmra.mxu0 %v62
  %v254 = vpop.f32.mrf.mxu0
  %v255 = vadd.f32 %v76, %v254
  %v256 = vpop.f32.mrf.mxu0
  %257 = vmatprep.mubr.f32.mxu0 0.0
  %258 = vmatmul.mubr.f32.gmra.mxu0 %v63
  %v259 = vpop.f32.mrf.mxu0
  %v260 = vadd.f32 %v76, %v259
  %v261 = vpop.f32.mrf.mxu0
  %262 = vmatprep.mubr.f32.mxu0 0.0
  %263 = vmatmul.mubr.f32.gmra.mxu0 %v64
  %v264 = vpop.f32.mrf.mxu0
  %v265 = vadd.f32 %v76, %v264
  %v266 = vpop.f32.mrf.mxu0
  %267 = vmatprep.mubr.f32.mxu0 0.0
  %268 = vmatmul.mubr.f32.gmra.mxu0 %v65
  %v269 = vpop.f32.mrf.mxu0
  %v270 = vadd.f32 %v76, %v269
  %v271 = vpop.f32.mrf.mxu0
  %272 = vmatprep.mubr.f32.mxu0 0.0
  %273 = vmatmul.mubr.f32.gmra.mxu0 %v66
  %v274 = vpop.f32.mrf.mxu0
  %v275 = vadd.f32 %v76, %v274
  %v276 = vpop.f32.mrf.mxu0
  %277 = vmatprep.mubr.f32.mxu0 0.0
  %278 = vmatmul.mubr.f32.gmra.mxu0 %v67
  %v279 = vpop.f32.mrf.mxu0
  %v280 = vadd.f32 %v76, %v279
  %v281 = vpop.f32.mrf.mxu0
  %282 = vmatprep.mubr.f32.mxu0 0.0
  %283 = vmatmul.mubr.f32.gmra.mxu0 %v68
  %v284 = vpop.f32.mrf.mxu0
  %v285 = vadd.f32 %v76, %v284
  %v286 = vpop.f32.mrf.mxu0
  %287 = vmatprep.mubr.f32.mxu0 0.0
  %288 = vmatmul.mubr.f32.gmra.mxu0 %v69
  %v289 = vpop.f32.mrf.mxu0
  %v290 = vadd.f32 %v76, %v289
  %v291 = vpop.f32.mrf.mxu0
  %292 = vmatprep.mubr.f32.mxu0 0.0
  %293 = vmatmul.mubr.f32.gmra.mxu0 %v70
  %v294 = vpop.f32.mrf.mxu0
  %v295 = vadd.f32 %v76, %v294
  %v296 = vpop.f32.mrf.mxu0
  %297 = vmatprep.mubr.f32.mxu0 0.0
  %298 = vmatmul.mubr.f32.gmra.mxu0 %v71
  %v299 = vpop.f32.mrf.mxu0
  %v300 = vadd.f32 %v76, %v299
  %v301 = vpop.f32.mrf.mxu0
  %302 = vdwg.mxu0
  %v303 = vmax.f32 %v145, 0.0
  %v304 = vmax.f32 %v150, 0.0
  %v305 = vmax.f32 %v155, 0.0
  %v306 = vmax.f32 %v160, 0.0
  %v307 = vmax.f32 %v165, 0.0
  %v308 = vmax.f32 %v170, 0.0
  %v309 = vmax.f32 %v175, 0.0
  %v310 = vmax.f32 %v180, 0.0
  %v311 = vmax.f32 %v185, 0.0
  %v312 = vmax.f32 %v190, 0.0
  %v313 = vmax.f32 %v195, 0.0
  %v314 = vmax.f32 %v200, 0.0
  %v315 = vmax.f32 %v205, 0.0
  %v316 = vmax.f32 %v210, 0.0
  %v317 = vmax.f32 %v215, 0.0
  %v318 = vmax.f32 %v220, 0.0
  %v319 = vmax.f32 %v225, 0.0
  %v320 = vmax.f32 %v230, 0.0
  %v321 = vmax.f32 %v235, 0.0
  %v322 = vmax.f32 %v240, 0.0
  %v323 = vmax.f32 %v245, 0.0
  %v324 = vmax.f32 %v250, 0.0
  %v325 = vmax.f32 %v255, 0.0
  %v326 = vmax.f32 %v260, 0.0
  %v327 = vmax.f32 %v265, 0.0
  %v328 = vmax.f32 %v270, 0.0
  %v329 = vmax.f32 %v275, 0.0
  %v330 = vmax.f32 %v280, 0.0
  %v331 = vmax.f32 %v285, 0.0
  %v332 = vmax.f32 %v290, 0.0
  %v333 = vmax.f32 %v295, 0.0
  %v334 = vmax.f32 %v300, 0.0
  %vm335 = vcmask 261120
  %v336 = vsel %vm335, %v303, 0.0
  %v337 = vsel %vm335, %v304, 0.0
  %v338 = vadd.f32 %v336, %v337
  %v339 = vsel %vm335, %v305, 0.0
  %v340 = vadd.f32 %v338, %v339
  %v341 = vsel %vm335, %v306, 0.0
  %v342 = vadd.f32 %v340, %v341
  %v343 = vsel %vm335, %v307, 0.0
  %v344 = vadd.f32 %v342, %v343
  %v345 = vsel %vm335, %v308, 0.0
  %v346 = vadd.f32 %v344, %v345
  %v347 = vsel %vm335, %v309, 0.0
  %v348 = vadd.f32 %v346, %v347
  %v349 = vsel %vm335, %v310, 0.0
  %v350 = vadd.f32 %v348, %v349
  %v351 = vsel %vm335, %v311, 0.0
  %v352 = vadd.f32 %v350, %v351
  %v353 = vsel %vm335, %v312, 0.0
  %v354 = vadd.f32 %v352, %v353
  %v355 = vsel %vm335, %v313, 0.0
  %v356 = vadd.f32 %v354, %v355
  %v357 = vsel %vm335, %v314, 0.0
  %v358 = vadd.f32 %v356, %v357
  %v359 = vsel %vm335, %v315, 0.0
  %v360 = vadd.f32 %v358, %v359
  %v361 = vsel %vm335, %v316, 0.0
  %v362 = vadd.f32 %v360, %v361
  %v363 = vsel %vm335, %v317, 0.0
  %v364 = vadd.f32 %v362, %v363
  %v365 = vsel %vm335, %v318, 0.0
  %v366 = vadd.f32 %v364, %v365
  %v367 = vsel %vm335, %v319, 0.0
  %v368 = vadd.f32 %v366, %v367
  %v369 = vsel %vm335, %v320, 0.0
  %v370 = vadd.f32 %v368, %v369
  %v371 = vsel %vm335, %v321, 0.0
  %v372 = vadd.f32 %v370, %v371
  %v373 = vsel %vm335, %v322, 0.0
  %v374 = vadd.f32 %v372, %v373
  %v375 = vsel %vm335, %v323, 0.0
  %v376 = vadd.f32 %v374, %v375
  %v377 = vsel %vm335, %v324, 0.0
  %v378 = vadd.f32 %v376, %v377
  %v379 = vsel %vm335, %v325, 0.0
  %v380 = vadd.f32 %v378, %v379
  %v381 = vsel %vm335, %v326, 0.0
  %v382 = vadd.f32 %v380, %v381
  %v383 = vsel %vm335, %v327, 0.0
  %v384 = vadd.f32 %v382, %v383
  %v385 = vsel %vm335, %v328, 0.0
  %v386 = vadd.f32 %v384, %v385
  %v387 = vsel %vm335, %v329, 0.0
  %v388 = vadd.f32 %v386, %v387
  %v389 = vsel %vm335, %v330, 0.0
  %v390 = vadd.f32 %v388, %v389
  %v391 = vsel %vm335, %v331, 0.0
  %v392 = vadd.f32 %v390, %v391
  %v393 = vsel %vm335, %v332, 0.0
  %v394 = vadd.f32 %v392, %v393
  %v395 = vsel %vm335, %v333, 0.0
  %v396 = vadd.f32 %v394, %v395
  %v397 = vsel %vm335, %v334, 0.0
  %v398 = vadd.f32 %v396, %v397
  %v399 = vrot.slane %v398, 4
  %v400 = vadd.f32 %v398, %v399
  %v401 = vrot.slane %v400, 2
  %v402 = vadd.f32 %v400, %v401
  %v403 = vrot.slane %v402, 1
  %v404 = vadd.f32 %v402, %v403
  %v405 = vmul.f32 %v404, 0.00390625
  %v406 = vld [vmem:[%s0 + $0x100] sm:$0xff]
  %v407 = vld [vmem:[%s0 + $0x108] sm:$0xff]
  %v408 = vld [vmem:[%s0 + $0x110] sm:$0xff]
  %v409 = vld [vmem:[%s0 + $0x118] sm:$0xff]
  %v410 = vld [vmem:[%s0 + $0x120] sm:$0xff]
  %v411 = vld [vmem:[%s0 + $0x128] sm:$0xff]
  %v412 = vld [vmem:[%s0 + $0x130] sm:$0xff]
  %v413 = vld [vmem:[%s0 + $0x138] sm:$0xff]
  %v414 = vld [vmem:[%s0 + $0x140] sm:$0xff]
  %v415 = vld [vmem:[%s0 + $0x148] sm:$0xff]
  %v416 = vld [vmem:[%s0 + $0x150] sm:$0xff]
  %v417 = vld [vmem:[%s0 + $0x158] sm:$0xff]
  %v418 = vld [vmem:[%s0 + $0x160] sm:$0xff]
  %v419 = vld [vmem:[%s0 + $0x168] sm:$0xff]
  %v420 = vld [vmem:[%s0 + $0x170] sm:$0xff]
  %v421 = vld [vmem:[%s0 + $0x178] sm:$0xff]
  %v422 = vld [vmem:[%s0 + $0x180] sm:$0xff]
  %v423 = vld [vmem:[%s0 + $0x188] sm:$0xff]
  %v424 = vld [vmem:[%s0 + $0x190] sm:$0xff]
  %v425 = vld [vmem:[%s0 + $0x198] sm:$0xff]
  %v426 = vld [vmem:[%s0 + $0x1a0] sm:$0xff]
  %v427 = vld [vmem:[%s0 + $0x1a8] sm:$0xff]
  %v428 = vld [vmem:[%s0 + $0x1b0] sm:$0xff]
  %v429 = vld [vmem:[%s0 + $0x1b8] sm:$0xff]
  %v430 = vld [vmem:[%s0 + $0x1c0] sm:$0xff]
  %v431 = vld [vmem:[%s0 + $0x1c8] sm:$0xff]
  %v432 = vld [vmem:[%s0 + $0x1d0] sm:$0xff]
  %v433 = vld [vmem:[%s0 + $0x1d8] sm:$0xff]
  %v434 = vld [vmem:[%s0 + $0x1e0] sm:$0xff]
  %v435 = vld [vmem:[%s0 + $0x1e8] sm:$0xff]
  %v436 = vld [vmem:[%s0 + $0x1f0] sm:$0xff]
  %v437 = vld [vmem:[%s0 + $0x1f8] sm:$0xff]
  %438 = vmatprep.subr.mxu0 0.0
  %439 = vmatpush1.msra.mxu0 %v38
  %440 = vmatprep.subr.mxu0 0.0
  %441 = vmatpush1.msra.mxu0 %v37
  %442 = vmatprep.subr.mxu0 0.0
  %443 = vmatpush1.msra.mxu0 %v36
  %444 = vmatprep.subr.mxu0 0.0
  %445 = vmatpush1.msra.mxu0 %v35
  %446 = vmatprep.subr.mxu0 0.0
  %447 = vmatpush1.msra.mxu0 %v34
  %448 = vmatprep.subr.mxu0 0.0
  %449 = vmatpush1.msra.mxu0 %v33
  %450 = vmatprep.subr.mxu0 0.0
  %451 = vmatpush1.msra.mxu0 %v32
  %452 = vmatprep.subr.mxu0 0.0
  %453 = vmatpush1.msra.mxu0 %v31
  %454 = vmatprep.subr.mxu0 0.0
  %455 = vmatpush1.msra.mxu0 %v30
  %456 = vmatprep.subr.mxu0 0.0
  %457 = vmatpush1.msra.mxu0 %v29
  %458 = vmatprep.subr.mxu0 0.0
  %459 = vmatpush1.msra.mxu0 %v28
  %460 = vmatprep.subr.mxu0 0.0
  %461 = vmatpush1.msra.mxu0 %v27
  %462 = vmatprep.subr.mxu0 0.0
  %463 = vmatpush1.msra.mxu0 %v26
  %464 = vmatprep.subr.mxu0 0.0
  %465 = vmatpush1.msra.mxu0 %v25
  %466 = vmatprep.subr.mxu0 0.0
  %467 = vmatpush1.msra.mxu0 %v24
  %468 = vmatprep.subr.mxu0 0.0
  %469 = vmatpush1.msra.mxu0 %v23
  %470 = vmatprep.subr.mxu0 0.0
  %471 = vmatpush2.msra.mxu0 0.0
  %472 = vmatprep.subr.mxu0 0.0
  %473 = vmatpush2.msra.mxu0 0.0
  %474 = vmatprep.subr.mxu0 0.0
  %475 = vmatpush2.msra.mxu0 0.0
  %476 = vmatprep.subr.mxu0 0.0
  %477 = vmatpush2.msra.mxu0 0.0
  %478 = vmatprep.subr.mxu0 0.0
  %479 = vmatpush2.msra.mxu0 0.0
  %480 = vmatprep.subr.mxu0 0.0
  %481 = vmatpush2.msra.mxu0 0.0
  %482 = vmatprep.subr.mxu0 0.0
  %483 = vmatpush2.msra.mxu0 0.0
  %484 = vmatprep.subr.mxu0 0.0
  %485 = vmatpush2.msra.mxu0 0.0
  %486 = vmatprep.subr.mxu0 0.0
  %487 = vmatpush2.msra.mxu0 0.0
  %488 = vmatprep.subr.mxu0 0.0
  %489 = vmatpush2.msra.mxu0 0.0
  %490 = vmatprep.subr.mxu0 0.0
  %491 = vmatpush2.msra.mxu0 0.0
  %492 = vmatprep.subr.mxu0 0.0
  %493 = vmatpush2.msra.mxu0 0.0
  %494 = vmatprep.subr.mxu0 0.0
  %495 = vmatpush2.msra.mxu0 0.0
  %496 = vmatprep.subr.mxu0 0.0
  %497 = vmatpush2.msra.mxu0 0.0
  %498 = vmatprep.subr.mxu0 0.0
  %499 = vmatpush2.msra.mxu0 0.0
  %500 = vmatprep.subr.mxu0 0.0
  %501 = vmatpush2.msra.mxu0 0.0
  %502 = vmatprep.mubr.f32.mxu0 0.0
  %503 = vmatmul.mubr.f32.gmra.mxu0 %v406
  %v504 = vpop.f32.mrf.mxu0
  %v505 = vadd.f32 %v76, %v504
  %v506 = vpop.f32.mrf.mxu0
  %507 = vmatprep.mubr.f32.mxu0 0.0
  %508 = vmatmul.mubr.f32.gmra.mxu0 %v407
  %v509 = vpop.f32.mrf.mxu0
  %v510 = vadd.f32 %v76, %v509
  %v511 = vpop.f32.mrf.mxu0
  %512 = vmatprep.mubr.f32.mxu0 0.0
  %513 = vmatmul.mubr.f32.gmra.mxu0 %v408
  %v514 = vpop.f32.mrf.mxu0
  %v515 = vadd.f32 %v76, %v514
  %v516 = vpop.f32.mrf.mxu0
  %517 = vmatprep.mubr.f32.mxu0 0.0
  %518 = vmatmul.mubr.f32.gmra.mxu0 %v409
  %v519 = vpop.f32.mrf.mxu0
  %v520 = vadd.f32 %v76, %v519
  %v521 = vpop.f32.mrf.mxu0
  %522 = vmatprep.mubr.f32.mxu0 0.0
  %523 = vmatmul.mubr.f32.gmra.mxu0 %v410
  %v524 = vpop.f32.mrf.mxu0
  %v525 = vadd.f32 %v76, %v524
  %v526 = vpop.f32.mrf.mxu0
  %527 = vmatprep.mubr.f32.mxu0 0.0
  %528 = vmatmul.mubr.f32.gmra.mxu0 %v411
  %v529 = vpop.f32.mrf.mxu0
  %v530 = vadd.f32 %v76, %v529
  %v531 = vpop.f32.mrf.mxu0
  %532 = vmatprep.mubr.f32.mxu0 0.0
  %533 = vmatmul.mubr.f32.gmra.mxu0 %v412
  %v534 = vpop.f32.mrf.mxu0
  %v535 = vadd.f32 %v76, %v534
  %v536 = vpop.f32.mrf.mxu0
  %537 = vmatprep.mubr.f32.mxu0 0.0
  %538 = vmatmul.mubr.f32.gmra.mxu0 %v413
  %v539 = vpop.f32.mrf.mxu0
  %v540 = vadd.f32 %v76, %v539
  %v541 = vpop.f32.mrf.mxu0
  %542 = vmatprep.mubr.f32.mxu0 0.0
  %543 = vmatmul.mubr.f32.gmra.mxu0 %v414
  %v544 = vpop.f32.mrf.mxu0
  %v545 = vadd.f32 %v76, %v544
  %v546 = vpop.f32.mrf.mxu0
  %547 = vmatprep.mubr.f32.mxu0 0.0
  %548 = vmatmul.mubr.f32.gmra.mxu0 %v415
  %v549 = vpop.f32.mrf.mxu0
  %v550 = vadd.f32 %v76, %v549
  %v551 = vpop.f32.mrf.mxu0
  %552 = vmatprep.mubr.f32.mxu0 0.0
  %553 = vmatmul.mubr.f32.gmra.mxu0 %v416
  %v554 = vpop.f32.mrf.mxu0
  %v555 = vadd.f32 %v76, %v554
  %v556 = vpop.f32.mrf.mxu0
  %557 = vmatprep.mubr.f32.mxu0 0.0
  %558 = vmatmul.mubr.f32.gmra.mxu0 %v417
  %v559 = vpop.f32.mrf.mxu0
  %v560 = vadd.f32 %v76, %v559
  %v561 = vpop.f32.mrf.mxu0
  %562 = vmatprep.mubr.f32.mxu0 0.0
  %563 = vmatmul.mubr.f32.gmra.mxu0 %v418
  %v564 = vpop.f32.mrf.mxu0
  %v565 = vadd.f32 %v76, %v564
  %v566 = vpop.f32.mrf.mxu0
  %567 = vmatprep.mubr.f32.mxu0 0.0
  %568 = vmatmul.mubr.f32.gmra.mxu0 %v419
  %v569 = vpop.f32.mrf.mxu0
  %v570 = vadd.f32 %v76, %v569
  %v571 = vpop.f32.mrf.mxu0
  %572 = vmatprep.mubr.f32.mxu0 0.0
  %573 = vmatmul.mubr.f32.gmra.mxu0 %v420
  %v574 = vpop.f32.mrf.mxu0
  %v575 = vadd.f32 %v76, %v574
  %v576 = vpop.f32.mrf.mxu0
  %577 = vmatprep.mubr.f32.mxu0 0.0
  %578 = vmatmul.mubr.f32.gmra.mxu0 %v421
  %v579 = vpop.f32.mrf.mxu0
  %v580 = vadd.f32 %v76, %v579
  %v581 = vpop.f32.mrf.mxu0
  %582 = vmatprep.mubr.f32.mxu0 0.0
  %583 = vmatmul.mubr.f32.gmra.mxu0 %v422
  %v584 = vpop.f32.mrf.mxu0
  %v585 = vadd.f32 %v76, %v584
  %v586 = vpop.f32.mrf.mxu0
  %587 = vmatprep.mubr.f32.mxu0 0.0
  %588 = vmatmul.mubr.f32.gmra.mxu0 %v423
  %v589 = vpop.f32.mrf.mxu0
  %v590 = vadd.f32 %v76, %v589
  %v591 = vpop.f32.mrf.mxu0
  %592 = vmatprep.mubr.f32.mxu0 0.0
  %593 = vmatmul.mubr.f32.gmra.mxu0 %v424
  %v594 = vpop.f32.mrf.mxu0
  %v595 = vadd.f32 %v76, %v594
  %v596 = vpop.f32.mrf.mxu0
  %597 = vmatprep.mubr.f32.mxu0 0.0
  %598 = vmatmul.mubr.f32.gmra.mxu0 %v425
  %v599 = vpop.f32.mrf.mxu0
  %v600 = vadd.f32 %v76, %v599
  %v601 = vpop.f32.mrf.mxu0
  %602 = vmatprep.mubr.f32.mxu0 0.0
  %603 = vmatmul.mubr.f32.gmra.mxu0 %v426
  %v604 = vpop.f32.mrf.mxu0
  %v605 = vadd.f32 %v76, %v604
  %v606 = vpop.f32.mrf.mxu0
  %607 = vmatprep.mubr.f32.mxu0 0.0
  %608 = vmatmul.mubr.f32.gmra.mxu0 %v427
  %v609 = vpop.f32.mrf.mxu0
  %v610 = vadd.f32 %v76, %v609
  %v611 = vpop.f32.mrf.mxu0
  %612 = vmatprep.mubr.f32.mxu0 0.0
  %613 = vmatmul.mubr.f32.gmra.mxu0 %v428
  %v614 = vpop.f32.mrf.mxu0
  %v615 = vadd.f32 %v76, %v614
  %v616 = vpop.f32.mrf.mxu0
  %617 = vmatprep.mubr.f32.mxu0 0.0
  %618 = vmatmul.mubr.f32.gmra.mxu0 %v429
  %v619 = vpop.f32.mrf.mxu0
  %v620 = vadd.f32 %v76, %v619
  %v621 = vpop.f32.mrf.mxu0
  %622 = vmatprep.mubr.f32.mxu0 0.0
  %623 = vmatmul.mubr.f32.gmra.mxu0 %v430
  %v624 = vpop.f32.mrf.mxu0
  %v625 = vadd.f32 %v76, %v624
  %v626 = vpop.f32.mrf.mxu0
  %627 = vmatprep.mubr.f32.mxu0 0.0
  %628 = vmatmul.mubr.f32.gmra.mxu0 %v431
  %v629 = vpop.f32.mrf.mxu0
  %v630 = vadd.f32 %v76, %v629
  %v631 = vpop.f32.mrf.mxu0
  %632 = vmatprep.mubr.f32.mxu0 0.0
  %633 = vmatmul.mubr.f32.gmra.mxu0 %v432
  %v634 = vpop.f32.mrf.mxu0
  %v635 = vadd.f32 %v76, %v634
  %v636 = vpop.f32.mrf.mxu0
  %637 = vmatprep.mubr.f32.mxu0 0.0
  %638 = vmatmul.mubr.f32.gmra.mxu0 %v433
  %v639 = vpop.f32.mrf.mxu0
  %v640 = vadd.f32 %v76, %v639
  %v641 = vpop.f32.mrf.mxu0
  %642 = vmatprep.mubr.f32.mxu0 0.0
  %643 = vmatmul.mubr.f32.gmra.mxu0 %v434
  %v644 = vpop.f32.mrf.mxu0
  %v645 = vadd.f32 %v76, %v644
  %v646 = vpop.f32.mrf.mxu0
  %647 = vmatprep.mubr.f32.mxu0 0.0
  %648 = vmatmul.mubr.f32.gmra.mxu0 %v435
  %v649 = vpop.f32.mrf.mxu0
  %v650 = vadd.f32 %v76, %v649
  %v651 = vpop.f32.mrf.mxu0
  %652 = vmatprep.mubr.f32.mxu0 0.0
  %653 = vmatmul.mubr.f32.gmra.mxu0 %v436
  %v654 = vpop.f32.mrf.mxu0
  %v655 = vadd.f32 %v76, %v654
  %v656 = vpop.f32.mrf.mxu0
  %657 = vmatprep.mubr.f32.mxu0 0.0
  %658 = vmatmul.mubr.f32.gmra.mxu0 %v437
  %v659 = vpop.f32.mrf.mxu0
  %v660 = vadd.f32 %v76, %v659
  %v661 = vpop.f32.mrf.mxu0
  %662 = vdwg.mxu0
  %v663 = vmax.f32 %v505, 0.0
  %v664 = vmax.f32 %v510, 0.0
  %v665 = vmax.f32 %v515, 0.0
  %v666 = vmax.f32 %v520, 0.0
  %v667 = vmax.f32 %v525, 0.0
  %v668 = vmax.f32 %v530, 0.0
  %v669 = vmax.f32 %v535, 0.0
  %v670 = vmax.f32 %v540, 0.0
  %v671 = vmax.f32 %v545, 0.0
  %v672 = vmax.f32 %v550, 0.0
  %v673 = vmax.f32 %v555, 0.0
  %v674 = vmax.f32 %v560, 0.0
  %v675 = vmax.f32 %v565, 0.0
  %v676 = vmax.f32 %v570, 0.0
  %v677 = vmax.f32 %v575, 0.0
  %v678 = vmax.f32 %v580, 0.0
  %v679 = vmax.f32 %v585, 0.0
  %v680 = vmax.f32 %v590, 0.0
  %v681 = vmax.f32 %v595, 0.0
  %v682 = vmax.f32 %v600, 0.0
  %v683 = vmax.f32 %v605, 0.0
  %v684 = vmax.f32 %v610, 0.0
  %v685 = vmax.f32 %v615, 0.0
  %v686 = vmax.f32 %v620, 0.0
  %v687 = vmax.f32 %v625, 0.0
  %v688 = vmax.f32 %v630, 0.0
  %v689 = vmax.f32 %v635, 0.0
  %v690 = vmax.f32 %v640, 0.0
  %v691 = vmax.f32 %v645, 0.0
  %v692 = vmax.f32 %v650, 0.0
  %v693 = vmax.f32 %v655, 0.0
  %v694 = vmax.f32 %v660, 0.0
  %v695 = vsel %vm335, %v663, 0.0
  %v696 = vsel %vm335, %v664, 0.0
  %v697 = vadd.f32 %v695, %v696
  %v698 = vsel %vm335, %v665, 0.0
  %v699 = vadd.f32 %v697, %v698
  %v700 = vsel %vm335, %v666, 0.0
  %v701 = vadd.f32 %v699, %v700
  %v702 = vsel %vm335, %v667, 0.0
  %v703 = vadd.f32 %v701, %v702
  %v704 = vsel %vm335, %v668, 0.0
  %v705 = vadd.f32 %v703, %v704
  %v706 = vsel %vm335, %v669, 0.0
  %v707 = vadd.f32 %v705, %v706
  %v708 = vsel %vm335, %v670, 0.0
  %v709 = vadd.f32 %v707, %v708
  %v710 = vsel %vm335, %v671, 0.0
  %v711 = vadd.f32 %v709, %v710
  %v712 = vsel %vm335, %v672, 0.0
  %v713 = vadd.f32 %v711, %v712
  %v714 = vsel %vm335, %v673, 0.0
  %v715 = vadd.f32 %v713, %v714
  %v716 = vsel %vm335, %v674, 0.0
  %v717 = vadd.f32 %v715, %v716
  %v718 = vsel %vm335, %v675, 0.0
  %v719 = vadd.f32 %v717, %v718
  %v720 = vsel %vm335, %v676, 0.0
  %v721 = vadd.f32 %v719, %v720
  %v722 = vsel %vm335, %v677, 0.0
  %v723 = vadd.f32 %v721, %v722
  %v724 = vsel %vm335, %v678, 0.0
  %v725 = vadd.f32 %v723, %v724
  %v726 = vsel %vm335, %v679, 0.0
  %v727 = vadd.f32 %v725, %v726
  %v728 = vsel %vm335, %v680, 0.0
  %v729 = vadd.f32 %v727, %v728
  %v730 = vsel %vm335, %v681, 0.0
  %v731 = vadd.f32 %v729, %v730
  %v732 = vsel %vm335, %v682, 0.0
  %v733 = vadd.f32 %v731, %v732
  %v734 = vsel %vm335, %v683, 0.0
  %v735 = vadd.f32 %v733, %v734
  %v736 = vsel %vm335, %v684, 0.0
  %v737 = vadd.f32 %v735, %v736
  %v738 = vsel %vm335, %v685, 0.0
  %v739 = vadd.f32 %v737, %v738
  %v740 = vsel %vm335, %v686, 0.0
  %v741 = vadd.f32 %v739, %v740
  %v742 = vsel %vm335, %v687, 0.0
  %v743 = vadd.f32 %v741, %v742
  %v744 = vsel %vm335, %v688, 0.0
  %v745 = vadd.f32 %v743, %v744
  %v746 = vsel %vm335, %v689, 0.0
  %v747 = vadd.f32 %v745, %v746
  %v748 = vsel %vm335, %v690, 0.0
  %v749 = vadd.f32 %v747, %v748
  %v750 = vsel %vm335, %v691, 0.0
  %v751 = vadd.f32 %v749, %v750
  %v752 = vsel %vm335, %v692, 0.0
  %v753 = vadd.f32 %v751, %v752
  %v754 = vsel %vm335, %v693, 0.0
  %v755 = vadd.f32 %v753, %v754
  %v756 = vsel %vm335, %v694, 0.0
  %v757 = vadd.f32 %v755, %v756
  %v758 = vrot.slane %v757, 4
  %v759 = vadd.f32 %v757, %v758
  %v760 = vrot.slane %v759, 2
  %v761 = vadd.f32 %v759, %v760
  %v762 = vrot.slane %v761, 1
  %v763 = vadd.f32 %v761, %v762
  %v764 = vmul.f32 %v763, 0.00390625
  %v765 = vld [vmem:[%s0 + $0x200] sm:$0xff]
  %v766 = vld [vmem:[%s0 + $0x208] sm:$0xff]
  %v767 = vld [vmem:[%s0 + $0x210] sm:$0xff]
  %v768 = vld [vmem:[%s0 + $0x218] sm:$0xff]
  %v769 = vld [vmem:[%s0 + $0x220] sm:$0xff]
  %v770 = vld [vmem:[%s0 + $0x228] sm:$0xff]
  %v771 = vld [vmem:[%s0 + $0x230] sm:$0xff]
  %v772 = vld [vmem:[%s0 + $0x238] sm:$0xff]
  %v773 = vld [vmem:[%s0 + $0x240] sm:$0xff]
  %v774 = vld [vmem:[%s0 + $0x248] sm:$0xff]
  %v775 = vld [vmem:[%s0 + $0x250] sm:$0xff]
  %v776 = vld [vmem:[%s0 + $0x258] sm:$0xff]
  %v777 = vld [vmem:[%s0 + $0x260] sm:$0xff]
  %v778 = vld [vmem:[%s0 + $0x268] sm:$0xff]
  %v779 = vld [vmem:[%s0 + $0x270] sm:$0xff]
  %v780 = vld [vmem:[%s0 + $0x278] sm:$0xff]
  %v781 = vld [vmem:[%s0 + $0x280] sm:$0xff]
  %v782 = vld [vmem:[%s0 + $0x288] sm:$0xff]
  %v783 = vld [vmem:[%s0 + $0x290] sm:$0xff]
  %v784 = vld [vmem:[%s0 + $0x298] sm:$0xff]
  %v785 = vld [vmem:[%s0 + $0x2a0] sm:$0xff]
  %v786 = vld [vmem:[%s0 + $0x2a8] sm:$0xff]
  %v787 = vld [vmem:[%s0 + $0x2b0] sm:$0xff]
  %v788 = vld [vmem:[%s0 + $0x2b8] sm:$0xff]
  %v789 = vld [vmem:[%s0 + $0x2c0] sm:$0xff]
  %v790 = vld [vmem:[%s0 + $0x2c8] sm:$0xff]
  %v791 = vld [vmem:[%s0 + $0x2d0] sm:$0xff]
  %v792 = vld [vmem:[%s0 + $0x2d8] sm:$0xff]
  %v793 = vld [vmem:[%s0 + $0x2e0] sm:$0xff]
  %v794 = vld [vmem:[%s0 + $0x2e8] sm:$0xff]
  %v795 = vld [vmem:[%s0 + $0x2f0] sm:$0xff]
  %v796 = vld [vmem:[%s0 + $0x2f8] sm:$0xff]
  %797 = vmatprep.subr.mxu0 0.0
  %798 = vmatpush1.msra.mxu0 %v38
  %799 = vmatprep.subr.mxu0 0.0
  %800 = vmatpush1.msra.mxu0 %v37
  %801 = vmatprep.subr.mxu0 0.0
  %802 = vmatpush1.msra.mxu0 %v36
  %803 = vmatprep.subr.mxu0 0.0
  %804 = vmatpush1.msra.mxu0 %v35
  %805 = vmatprep.subr.mxu0 0.0
  %806 = vmatpush1.msra.mxu0 %v34
  %807 = vmatprep.subr.mxu0 0.0
  %808 = vmatpush1.msra.mxu0 %v33
  %809 = vmatprep.subr.mxu0 0.0
  %810 = vmatpush1.msra.mxu0 %v32
  %811 = vmatprep.subr.mxu0 0.0
  %812 = vmatpush1.msra.mxu0 %v31
  %813 = vmatprep.subr.mxu0 0.0
  %814 = vmatpush1.msra.mxu0 %v30
  %815 = vmatprep.subr.mxu0 0.0
  %816 = vmatpush1.msra.mxu0 %v29
  %817 = vmatprep.subr.mxu0 0.0
  %818 = vmatpush1.msra.mxu0 %v28
  %819 = vmatprep.subr.mxu0 0.0
  %820 = vmatpush1.msra.mxu0 %v27
  %821 = vmatprep.subr.mxu0 0.0
  %822 = vmatpush1.msra.mxu0 %v26
  %823 = vmatprep.subr.mxu0 0.0
  %824 = vmatpush1.msra.mxu0 %v25
  %825 = vmatprep.subr.mxu0 0.0
  %826 = vmatpush1.msra.mxu0 %v24
  %827 = vmatprep.subr.mxu0 0.0
  %828 = vmatpush1.msra.mxu0 %v23
  %829 = vmatprep.subr.mxu0 0.0
  %830 = vmatpush2.msra.mxu0 0.0
  %831 = vmatprep.subr.mxu0 0.0
  %832 = vmatpush2.msra.mxu0 0.0
  %833 = vmatprep.subr.mxu0 0.0
  %834 = vmatpush2.msra.mxu0 0.0
  %835 = vmatprep.subr.mxu0 0.0
  %836 = vmatpush2.msra.mxu0 0.0
  %837 = vmatprep.subr.mxu0 0.0
  %838 = vmatpush2.msra.mxu0 0.0
  %839 = vmatprep.subr.mxu0 0.0
  %840 = vmatpush2.msra.mxu0 0.0
  %841 = vmatprep.subr.mxu0 0.0
  %842 = vmatpush2.msra.mxu0 0.0
  %843 = vmatprep.subr.mxu0 0.0
  %844 = vmatpush2.msra.mxu0 0.0
  %845 = vmatprep.subr.mxu0 0.0
  %846 = vmatpush2.msra.mxu0 0.0
  %847 = vmatprep.subr.mxu0 0.0
  %848 = vmatpush2.msra.mxu0 0.0
  %849 = vmatprep.subr.mxu0 0.0
  %850 = vmatpush2.msra.mxu0 0.0
  %851 = vmatprep.subr.mxu0 0.0
  %852 = vmatpush2.msra.mxu0 0.0
  %853 = vmatprep.subr.mxu0 0.0
  %854 = vmatpush2.msra.mxu0 0.0
  %855 = vmatprep.subr.mxu0 0.0
  %856 = vmatpush2.msra.mxu0 0.0
  %857 = vmatprep.subr.mxu0 0.0
  %858 = vmatpush2.msra.mxu0 0.0
  %859 = vmatprep.subr.mxu0 0.0
  %860 = vmatpush2.msra.mxu0 0.0
  %861 = vmatprep.mubr.f32.mxu0 0.0
  %862 = vmatmul.mubr.f32.gmra.mxu0 %v765
  %v863 = vpop.f32.mrf.mxu0
  %v864 = vadd.f32 %v76, %v863
  %v865 = vpop.f32.mrf.mxu0
  %866 = vmatprep.mubr.f32.mxu0 0.0
  %867 = vmatmul.mubr.f32.gmra.mxu0 %v766
  %v868 = vpop.f32.mrf.mxu0
  %v869 = vadd.f32 %v76, %v868
  %v870 = vpop.f32.mrf.mxu0
  %871 = vmatprep.mubr.f32.mxu0 0.0
  %872 = vmatmul.mubr.f32.gmra.mxu0 %v767
  %v873 = vpop.f32.mrf.mxu0
  %v874 = vadd.f32 %v76, %v873
  %v875 = vpop.f32.mrf.mxu0
  %876 = vmatprep.mubr.f32.mxu0 0.0
  %877 = vmatmul.mubr.f32.gmra.mxu0 %v768
  %v878 = vpop.f32.mrf.mxu0
  %v879 = vadd.f32 %v76, %v878
  %v880 = vpop.f32.mrf.mxu0
  %881 = vmatprep.mubr.f32.mxu0 0.0
  %882 = vmatmul.mubr.f32.gmra.mxu0 %v769
  %v883 = vpop.f32.mrf.mxu0
  %v884 = vadd.f32 %v76, %v883
  %v885 = vpop.f32.mrf.mxu0
  %886 = vmatprep.mubr.f32.mxu0 0.0
  %887 = vmatmul.mubr.f32.gmra.mxu0 %v770
  %v888 = vpop.f32.mrf.mxu0
  %v889 = vadd.f32 %v76, %v888
  %v890 = vpop.f32.mrf.mxu0
  %891 = vmatprep.mubr.f32.mxu0 0.0
  %892 = vmatmul.mubr.f32.gmra.mxu0 %v771
  %v893 = vpop.f32.mrf.mxu0
  %v894 = vadd.f32 %v76, %v893
  %v895 = vpop.f32.mrf.mxu0
  %896 = vmatprep.mubr.f32.mxu0 0.0
  %897 = vmatmul.mubr.f32.gmra.mxu0 %v772
  %v898 = vpop.f32.mrf.mxu0
  %v899 = vadd.f32 %v76, %v898
  %v900 = vpop.f32.mrf.mxu0
  %901 = vmatprep.mubr.f32.mxu0 0.0
  %902 = vmatmul.mubr.f32.gmra.mxu0 %v773
  %v903 = vpop.f32.mrf.mxu0
  %v904 = vadd.f32 %v76, %v903
  %v905 = vpop.f32.mrf.mxu0
  %906 = vmatprep.mubr.f32.mxu0 0.0
  %907 = vmatmul.mubr.f32.gmra.mxu0 %v774
  %v908 = vpop.f32.mrf.mxu0
  %v909 = vadd.f32 %v76, %v908
  %v910 = vpop.f32.mrf.mxu0
  %911 = vmatprep.mubr.f32.mxu0 0.0
  %912 = vmatmul.mubr.f32.gmra.mxu0 %v775
  %v913 = vpop.f32.mrf.mxu0
  %v914 = vadd.f32 %v76, %v913
  %v915 = vpop.f32.mrf.mxu0
  %916 = vmatprep.mubr.f32.mxu0 0.0
  %917 = vmatmul.mubr.f32.gmra.mxu0 %v776
  %v918 = vpop.f32.mrf.mxu0
  %v919 = vadd.f32 %v76, %v918
  %v920 = vpop.f32.mrf.mxu0
  %921 = vmatprep.mubr.f32.mxu0 0.0
  %922 = vmatmul.mubr.f32.gmra.mxu0 %v777
  %v923 = vpop.f32.mrf.mxu0
  %v924 = vadd.f32 %v76, %v923
  %v925 = vpop.f32.mrf.mxu0
  %926 = vmatprep.mubr.f32.mxu0 0.0
  %927 = vmatmul.mubr.f32.gmra.mxu0 %v778
  %v928 = vpop.f32.mrf.mxu0
  %v929 = vadd.f32 %v76, %v928
  %v930 = vpop.f32.mrf.mxu0
  %931 = vmatprep.mubr.f32.mxu0 0.0
  %932 = vmatmul.mubr.f32.gmra.mxu0 %v779
  %v933 = vpop.f32.mrf.mxu0
  %v934 = vadd.f32 %v76, %v933
  %v935 = vpop.f32.mrf.mxu0
  %936 = vmatprep.mubr.f32.mxu0 0.0
  %937 = vmatmul.mubr.f32.gmra.mxu0 %v780
  %v938 = vpop.f32.mrf.mxu0
  %v939 = vadd.f32 %v76, %v938
  %v940 = vpop.f32.mrf.mxu0
  %941 = vmatprep.mubr.f32.mxu0 0.0
  %942 = vmatmul.mubr.f32.gmra.mxu0 %v781
  %v943 = vpop.f32.mrf.mxu0
  %v944 = vadd.f32 %v76, %v943
  %v945 = vpop.f32.mrf.mxu0
  %946 = vmatprep.mubr.f32.mxu0 0.0
  %947 = vmatmul.mubr.f32.gmra.mxu0 %v782
  %v948 = vpop.f32.mrf.mxu0
  %v949 = vadd.f32 %v76, %v948
  %v950 = vpop.f32.mrf.mxu0
  %951 = vmatprep.mubr.f32.mxu0 0.0
  %952 = vmatmul.mubr.f32.gmra.mxu0 %v783
  %v953 = vpop.f32.mrf.mxu0
  %v954 = vadd.f32 %v76, %v953
  %v955 = vpop.f32.mrf.mxu0
  %956 = vmatprep.mubr.f32.mxu0 0.0
  %957 = vmatmul.mubr.f32.gmra.mxu0 %v784
  %v958 = vpop.f32.mrf.mxu0
  %v959 = vadd.f32 %v76, %v958
  %v960 = vpop.f32.mrf.mxu0
  %961 = vmatprep.mubr.f32.mxu0 0.0
  %962 = vmatmul.mubr.f32.gmra.mxu0 %v785
  %v963 = vpop.f32.mrf.mxu0
  %v964 = vadd.f32 %v76, %v963
  %v965 = vpop.f32.mrf.mxu0
  %966 = vmatprep.mubr.f32.mxu0 0.0
  %967 = vmatmul.mubr.f32.gmra.mxu0 %v786
  %v968 = vpop.f32.mrf.mxu0
  %v969 = vadd.f32 %v76, %v968
  %v970 = vpop.f32.mrf.mxu0
  %971 = vmatprep.mubr.f32.mxu0 0.0
  %972 = vmatmul.mubr.f32.gmra.mxu0 %v787
  %v973 = vpop.f32.mrf.mxu0
  %v974 = vadd.f32 %v76, %v973
  %v975 = vpop.f32.mrf.mxu0
  %976 = vmatprep.mubr.f32.mxu0 0.0
  %977 = vmatmul.mubr.f32.gmra.mxu0 %v788
  %v978 = vpop.f32.mrf.mxu0
  %v979 = vadd.f32 %v76, %v978
  %v980 = vpop.f32.mrf.mxu0
  %981 = vmatprep.mubr.f32.mxu0 0.0
  %982 = vmatmul.mubr.f32.gmra.mxu0 %v789
  %v983 = vpop.f32.mrf.mxu0
  %v984 = vadd.f32 %v76, %v983
  %v985 = vpop.f32.mrf.mxu0
  %986 = vmatprep.mubr.f32.mxu0 0.0
  %987 = vmatmul.mubr.f32.gmra.mxu0 %v790
  %v988 = vpop.f32.mrf.mxu0
  %v989 = vadd.f32 %v76, %v988
  %v990 = vpop.f32.mrf.mxu0
  %991 = vmatprep.mubr.f32.mxu0 0.0
  %992 = vmatmul.mubr.f32.gmra.mxu0 %v791
  %v993 = vpop.f32.mrf.mxu0
  %v994 = vadd.f32 %v76, %v993
  %v995 = vpop.f32.mrf.mxu0
  %996 = vmatprep.mubr.f32.mxu0 0.0
  %997 = vmatmul.mubr.f32.gmra.mxu0 %v792
  %v998 = vpop.f32.mrf.mxu0
  %v999 = vadd.f32 %v76, %v998
  %v1000 = vpop.f32.mrf.mxu0
  %1001 = vmatprep.mubr.f32.mxu0 0.0
  %1002 = vmatmul.mubr.f32.gmra.mxu0 %v793
  %v1003 = vpop.f32.mrf.mxu0
  %v1004 = vadd.f32 %v76, %v1003
  %v1005 = vpop.f32.mrf.mxu0
  %1006 = vmatprep.mubr.f32.mxu0 0.0
  %1007 = vmatmul.mubr.f32.gmra.mxu0 %v794
  %v1008 = vpop.f32.mrf.mxu0
  %v1009 = vadd.f32 %v76, %v1008
  %v1010 = vpop.f32.mrf.mxu0
  %1011 = vmatprep.mubr.f32.mxu0 0.0
  %1012 = vmatmul.mubr.f32.gmra.mxu0 %v795
  %v1013 = vpop.f32.mrf.mxu0
  %v1014 = vadd.f32 %v76, %v1013
  %v1015 = vpop.f32.mrf.mxu0
  %1016 = vmatprep.mubr.f32.mxu0 0.0
  %1017 = vmatmul.mubr.f32.gmra.mxu0 %v796
  %v1018 = vpop.f32.mrf.mxu0
  %v1019 = vadd.f32 %v76, %v1018
  %v1020 = vpop.f32.mrf.mxu0
  %1021 = vdwg.mxu0
  %v1022 = vmax.f32 %v864, 0.0
  %v1023 = vmax.f32 %v869, 0.0
  %v1024 = vmax.f32 %v874, 0.0
  %v1025 = vmax.f32 %v879, 0.0
  %v1026 = vmax.f32 %v884, 0.0
  %v1027 = vmax.f32 %v889, 0.0
  %v1028 = vmax.f32 %v894, 0.0
  %v1029 = vmax.f32 %v899, 0.0
  %v1030 = vmax.f32 %v904, 0.0
  %v1031 = vmax.f32 %v909, 0.0
  %v1032 = vmax.f32 %v914, 0.0
  %v1033 = vmax.f32 %v919, 0.0
  %v1034 = vmax.f32 %v924, 0.0
  %v1035 = vmax.f32 %v929, 0.0
  %v1036 = vmax.f32 %v934, 0.0
  %v1037 = vmax.f32 %v939, 0.0
  %v1038 = vmax.f32 %v944, 0.0
  %v1039 = vmax.f32 %v949, 0.0
  %v1040 = vmax.f32 %v954, 0.0
  %v1041 = vmax.f32 %v959, 0.0
  %v1042 = vmax.f32 %v964, 0.0
  %v1043 = vmax.f32 %v969, 0.0
  %v1044 = vmax.f32 %v974, 0.0
  %v1045 = vmax.f32 %v979, 0.0
  %v1046 = vmax.f32 %v984, 0.0
  %v1047 = vmax.f32 %v989, 0.0
  %v1048 = vmax.f32 %v994, 0.0
  %v1049 = vmax.f32 %v999, 0.0
  %v1050 = vmax.f32 %v1004, 0.0
  %v1051 = vmax.f32 %v1009, 0.0
  %v1052 = vmax.f32 %v1014, 0.0
  %v1053 = vmax.f32 %v1019, 0.0
  %v1054 = vsel %vm335, %v1022, 0.0
  %v1055 = vsel %vm335, %v1023, 0.0
  %v1056 = vadd.f32 %v1054, %v1055
  %v1057 = vsel %vm335, %v1024, 0.0
  %v1058 = vadd.f32 %v1056, %v1057
  %v1059 = vsel %vm335, %v1025, 0.0
  %v1060 = vadd.f32 %v1058, %v1059
  %v1061 = vsel %vm335, %v1026, 0.0
  %v1062 = vadd.f32 %v1060, %v1061
  %v1063 = vsel %vm335, %v1027, 0.0
  %v1064 = vadd.f32 %v1062, %v1063
  %v1065 = vsel %vm335, %v1028, 0.0
  %v1066 = vadd.f32 %v1064, %v1065
  %v1067 = vsel %vm335, %v1029, 0.0
  %v1068 = vadd.f32 %v1066, %v1067
  %v1069 = vsel %vm335, %v1030, 0.0
  %v1070 = vadd.f32 %v1068, %v1069
  %v1071 = vsel %vm335, %v1031, 0.0
  %v1072 = vadd.f32 %v1070, %v1071
  %v1073 = vsel %vm335, %v1032, 0.0
  %v1074 = vadd.f32 %v1072, %v1073
  %v1075 = vsel %vm335, %v1033, 0.0
  %v1076 = vadd.f32 %v1074, %v1075
  %v1077 = vsel %vm335, %v1034, 0.0
  %v1078 = vadd.f32 %v1076, %v1077
  %v1079 = vsel %vm335, %v1035, 0.0
  %v1080 = vadd.f32 %v1078, %v1079
  %v1081 = vsel %vm335, %v1036, 0.0
  %v1082 = vadd.f32 %v1080, %v1081
  %v1083 = vsel %vm335, %v1037, 0.0
  %v1084 = vadd.f32 %v1082, %v1083
  %v1085 = vsel %vm335, %v1038, 0.0
  %v1086 = vadd.f32 %v1084, %v1085
  %v1087 = vsel %vm335, %v1039, 0.0
  %v1088 = vadd.f32 %v1086, %v1087
  %v1089 = vsel %vm335, %v1040, 0.0
  %v1090 = vadd.f32 %v1088, %v1089
  %v1091 = vsel %vm335, %v1041, 0.0
  %v1092 = vadd.f32 %v1090, %v1091
  %v1093 = vsel %vm335, %v1042, 0.0
  %v1094 = vadd.f32 %v1092, %v1093
  %v1095 = vsel %vm335, %v1043, 0.0
  %v1096 = vadd.f32 %v1094, %v1095
  %v1097 = vsel %vm335, %v1044, 0.0
  %v1098 = vadd.f32 %v1096, %v1097
  %v1099 = vsel %vm335, %v1045, 0.0
  %v1100 = vadd.f32 %v1098, %v1099
  %v1101 = vsel %vm335, %v1046, 0.0
  %v1102 = vadd.f32 %v1100, %v1101
  %v1103 = vsel %vm335, %v1047, 0.0
  %v1104 = vadd.f32 %v1102, %v1103
  %v1105 = vsel %vm335, %v1048, 0.0
  %v1106 = vadd.f32 %v1104, %v1105
  %v1107 = vsel %vm335, %v1049, 0.0
  %v1108 = vadd.f32 %v1106, %v1107
  %v1109 = vsel %vm335, %v1050, 0.0
  %v1110 = vadd.f32 %v1108, %v1109
  %v1111 = vsel %vm335, %v1051, 0.0
  %v1112 = vadd.f32 %v1110, %v1111
  %v1113 = vsel %vm335, %v1052, 0.0
  %v1114 = vadd.f32 %v1112, %v1113
  %v1115 = vsel %vm335, %v1053, 0.0
  %v1116 = vadd.f32 %v1114, %v1115
  %v1117 = vrot.slane %v1116, 4
  %v1118 = vadd.f32 %v1116, %v1117
  %v1119 = vrot.slane %v1118, 2
  %v1120 = vadd.f32 %v1118, %v1119
  %v1121 = vrot.slane %v1120, 1
  %v1122 = vadd.f32 %v1120, %v1121
  %v1123 = vmul.f32 %v1122, 0.00390625
  %v1124 = vld [vmem:[%s0 + $0x300] sm:$0xff]
  %v1125 = vld [vmem:[%s0 + $0x308] sm:$0xff]
  %v1126 = vld [vmem:[%s0 + $0x310] sm:$0xff]
  %v1127 = vld [vmem:[%s0 + $0x318] sm:$0xff]
  %v1128 = vld [vmem:[%s0 + $0x320] sm:$0xff]
  %v1129 = vld [vmem:[%s0 + $0x328] sm:$0xff]
  %v1130 = vld [vmem:[%s0 + $0x330] sm:$0xff]
  %v1131 = vld [vmem:[%s0 + $0x338] sm:$0xff]
  %v1132 = vld [vmem:[%s0 + $0x340] sm:$0xff]
  %v1133 = vld [vmem:[%s0 + $0x348] sm:$0xff]
  %v1134 = vld [vmem:[%s0 + $0x350] sm:$0xff]
  %v1135 = vld [vmem:[%s0 + $0x358] sm:$0xff]
  %v1136 = vld [vmem:[%s0 + $0x360] sm:$0xff]
  %v1137 = vld [vmem:[%s0 + $0x368] sm:$0xff]
  %v1138 = vld [vmem:[%s0 + $0x370] sm:$0xff]
  %v1139 = vld [vmem:[%s0 + $0x378] sm:$0xff]
  %v1140 = vld [vmem:[%s0 + $0x380] sm:$0xff]
  %v1141 = vld [vmem:[%s0 + $0x388] sm:$0xff]
  %v1142 = vld [vmem:[%s0 + $0x390] sm:$0xff]
  %v1143 = vld [vmem:[%s0 + $0x398] sm:$0xff]
  %v1144 = vld [vmem:[%s0 + $0x3a0] sm:$0xff]
  %v1145 = vld [vmem:[%s0 + $0x3a8] sm:$0xff]
  %v1146 = vld [vmem:[%s0 + $0x3b0] sm:$0xff]
  %v1147 = vld [vmem:[%s0 + $0x3b8] sm:$0xff]
  %v1148 = vld [vmem:[%s0 + $0x3c0] sm:$0xff]
  %v1149 = vld [vmem:[%s0 + $0x3c8] sm:$0xff]
  %v1150 = vld [vmem:[%s0 + $0x3d0] sm:$0xff]
  %v1151 = vld [vmem:[%s0 + $0x3d8] sm:$0xff]
  %v1152 = vld [vmem:[%s0 + $0x3e0] sm:$0xff]
  %v1153 = vld [vmem:[%s0 + $0x3e8] sm:$0xff]
  %v1154 = vld [vmem:[%s0 + $0x3f0] sm:$0xff]
  %v1155 = vld [vmem:[%s0 + $0x3f8] sm:$0xff]
  %1156 = vmatprep.subr.mxu0 0.0
  %1157 = vmatpush1.msra.mxu0 %v38
  %1158 = vmatprep.subr.mxu0 0.0
  %1159 = vmatpush1.msra.mxu0 %v37
  %1160 = vmatprep.subr.mxu0 0.0
  %1161 = vmatpush1.msra.mxu0 %v36
  %1162 = vmatprep.subr.mxu0 0.0
  %1163 = vmatpush1.msra.mxu0 %v35
  %1164 = vmatprep.subr.mxu0 0.0
  %1165 = vmatpush1.msra.mxu0 %v34
  %1166 = vmatprep.subr.mxu0 0.0
  %1167 = vmatpush1.msra.mxu0 %v33
  %1168 = vmatprep.subr.mxu0 0.0
  %1169 = vmatpush1.msra.mxu0 %v32
  %1170 = vmatprep.subr.mxu0 0.0
  %1171 = vmatpush1.msra.mxu0 %v31
  %1172 = vmatprep.subr.mxu0 0.0
  %1173 = vmatpush1.msra.mxu0 %v30
  %1174 = vmatprep.subr.mxu0 0.0
  %1175 = vmatpush1.msra.mxu0 %v29
  %1176 = vmatprep.subr.mxu0 0.0
  %1177 = vmatpush1.msra.mxu0 %v28
  %1178 = vmatprep.subr.mxu0 0.0
  %1179 = vmatpush1.msra.mxu0 %v27
  %1180 = vmatprep.subr.mxu0 0.0
  %1181 = vmatpush1.msra.mxu0 %v26
  %1182 = vmatprep.subr.mxu0 0.0
  %1183 = vmatpush1.msra.mxu0 %v25
  %1184 = vmatprep.subr.mxu0 0.0
  %1185 = vmatpush1.msra.mxu0 %v24
  %1186 = vmatprep.subr.mxu0 0.0
  %1187 = vmatpush1.msra.mxu0 %v23
  %1188 = vmatprep.subr.mxu0 0.0
  %1189 = vmatpush2.msra.mxu0 0.0
  %1190 = vmatprep.subr.mxu0 0.0
  %1191 = vmatpush2.msra.mxu0 0.0
  %1192 = vmatprep.subr.mxu0 0.0
  %1193 = vmatpush2.msra.mxu0 0.0
  %1194 = vmatprep.subr.mxu0 0.0
  %1195 = vmatpush2.msra.mxu0 0.0
  %1196 = vmatprep.subr.mxu0 0.0
  %1197 = vmatpush2.msra.mxu0 0.0
  %1198 = vmatprep.subr.mxu0 0.0
  %1199 = vmatpush2.msra.mxu0 0.0
  %1200 = vmatprep.subr.mxu0 0.0
  %1201 = vmatpush2.msra.mxu0 0.0
  %1202 = vmatprep.subr.mxu0 0.0
  %1203 = vmatpush2.msra.mxu0 0.0
  %1204 = vmatprep.subr.mxu0 0.0
  %1205 = vmatpush2.msra.mxu0 0.0
  %1206 = vmatprep.subr.mxu0 0.0
  %1207 = vmatpush2.msra.mxu0 0.0
  %1208 = vmatprep.subr.mxu0 0.0
  %1209 = vmatpush2.msra.mxu0 0.0
  %1210 = vmatprep.subr.mxu0 0.0
  %1211 = vmatpush2.msra.mxu0 0.0
  %1212 = vmatprep.subr.mxu0 0.0
  %1213 = vmatpush2.msra.mxu0 0.0
  %1214 = vmatprep.subr.mxu0 0.0
  %1215 = vmatpush2.msra.mxu0 0.0
  %1216 = vmatprep.subr.mxu0 0.0
  %1217 = vmatpush2.msra.mxu0 0.0
  %1218 = vmatprep.subr.mxu0 0.0
  %1219 = vmatpush2.msra.mxu0 0.0
  %1220 = vmatprep.mubr.f32.mxu0 0.0
  %1221 = vmatmul.mubr.f32.gmra.mxu0 %v1124
  %v1222 = vpop.f32.mrf.mxu0
  %v1223 = vadd.f32 %v76, %v1222
  %v1224 = vpop.f32.mrf.mxu0
  %1225 = vmatprep.mubr.f32.mxu0 0.0
  %1226 = vmatmul.mubr.f32.gmra.mxu0 %v1125
  %v1227 = vpop.f32.mrf.mxu0
  %v1228 = vadd.f32 %v76, %v1227
  %v1229 = vpop.f32.mrf.mxu0
  %1230 = vmatprep.mubr.f32.mxu0 0.0
  %1231 = vmatmul.mubr.f32.gmra.mxu0 %v1126
  %v1232 = vpop.f32.mrf.mxu0
  %v1233 = vadd.f32 %v76, %v1232
  %v1234 = vpop.f32.mrf.mxu0
  %1235 = vmatprep.mubr.f32.mxu0 0.0
  %1236 = vmatmul.mubr.f32.gmra.mxu0 %v1127
  %v1237 = vpop.f32.mrf.mxu0
  %v1238 = vadd.f32 %v76, %v1237
  %v1239 = vpop.f32.mrf.mxu0
  %1240 = vmatprep.mubr.f32.mxu0 0.0
  %1241 = vmatmul.mubr.f32.gmra.mxu0 %v1128
  %v1242 = vpop.f32.mrf.mxu0
  %v1243 = vadd.f32 %v76, %v1242
  %v1244 = vpop.f32.mrf.mxu0
  %1245 = vmatprep.mubr.f32.mxu0 0.0
  %1246 = vmatmul.mubr.f32.gmra.mxu0 %v1129
  %v1247 = vpop.f32.mrf.mxu0
  %v1248 = vadd.f32 %v76, %v1247
  %v1249 = vpop.f32.mrf.mxu0
  %1250 = vmatprep.mubr.f32.mxu0 0.0
  %1251 = vmatmul.mubr.f32.gmra.mxu0 %v1130
  %v1252 = vpop.f32.mrf.mxu0
  %v1253 = vadd.f32 %v76, %v1252
  %v1254 = vpop.f32.mrf.mxu0
  %1255 = vmatprep.mubr.f32.mxu0 0.0
  %1256 = vmatmul.mubr.f32.gmra.mxu0 %v1131
  %v1257 = vpop.f32.mrf.mxu0
  %v1258 = vadd.f32 %v76, %v1257
  %v1259 = vpop.f32.mrf.mxu0
  %1260 = vmatprep.mubr.f32.mxu0 0.0
  %1261 = vmatmul.mubr.f32.gmra.mxu0 %v1132
  %v1262 = vpop.f32.mrf.mxu0
  %v1263 = vadd.f32 %v76, %v1262
  %v1264 = vpop.f32.mrf.mxu0
  %1265 = vmatprep.mubr.f32.mxu0 0.0
  %1266 = vmatmul.mubr.f32.gmra.mxu0 %v1133
  %v1267 = vpop.f32.mrf.mxu0
  %v1268 = vadd.f32 %v76, %v1267
  %v1269 = vpop.f32.mrf.mxu0
  %1270 = vmatprep.mubr.f32.mxu0 0.0
  %1271 = vmatmul.mubr.f32.gmra.mxu0 %v1134
  %v1272 = vpop.f32.mrf.mxu0
  %v1273 = vadd.f32 %v76, %v1272
  %v1274 = vpop.f32.mrf.mxu0
  %1275 = vmatprep.mubr.f32.mxu0 0.0
  %1276 = vmatmul.mubr.f32.gmra.mxu0 %v1135
  %v1277 = vpop.f32.mrf.mxu0
  %v1278 = vadd.f32 %v76, %v1277
  %v1279 = vpop.f32.mrf.mxu0
  %1280 = vmatprep.mubr.f32.mxu0 0.0
  %1281 = vmatmul.mubr.f32.gmra.mxu0 %v1136
  %v1282 = vpop.f32.mrf.mxu0
  %v1283 = vadd.f32 %v76, %v1282
  %v1284 = vpop.f32.mrf.mxu0
  %1285 = vmatprep.mubr.f32.mxu0 0.0
  %1286 = vmatmul.mubr.f32.gmra.mxu0 %v1137
  %v1287 = vpop.f32.mrf.mxu0
  %v1288 = vadd.f32 %v76, %v1287
  %v1289 = vpop.f32.mrf.mxu0
  %1290 = vmatprep.mubr.f32.mxu0 0.0
  %1291 = vmatmul.mubr.f32.gmra.mxu0 %v1138
  %v1292 = vpop.f32.mrf.mxu0
  %v1293 = vadd.f32 %v76, %v1292
  %v1294 = vpop.f32.mrf.mxu0
  %1295 = vmatprep.mubr.f32.mxu0 0.0
  %1296 = vmatmul.mubr.f32.gmra.mxu0 %v1139
  %v1297 = vpop.f32.mrf.mxu0
  %v1298 = vadd.f32 %v76, %v1297
  %v1299 = vpop.f32.mrf.mxu0
  %1300 = vmatprep.mubr.f32.mxu0 0.0
  %1301 = vmatmul.mubr.f32.gmra.mxu0 %v1140
  %v1302 = vpop.f32.mrf.mxu0
  %v1303 = vadd.f32 %v76, %v1302
  %v1304 = vpop.f32.mrf.mxu0
  %1305 = vmatprep.mubr.f32.mxu0 0.0
  %1306 = vmatmul.mubr.f32.gmra.mxu0 %v1141
  %v1307 = vpop.f32.mrf.mxu0
  %v1308 = vadd.f32 %v76, %v1307
  %v1309 = vpop.f32.mrf.mxu0
  %1310 = vmatprep.mubr.f32.mxu0 0.0
  %1311 = vmatmul.mubr.f32.gmra.mxu0 %v1142
  %v1312 = vpop.f32.mrf.mxu0
  %v1313 = vadd.f32 %v76, %v1312
  %v1314 = vpop.f32.mrf.mxu0
  %1315 = vmatprep.mubr.f32.mxu0 0.0
  %1316 = vmatmul.mubr.f32.gmra.mxu0 %v1143
  %v1317 = vpop.f32.mrf.mxu0
  %v1318 = vadd.f32 %v76, %v1317
  %v1319 = vpop.f32.mrf.mxu0
  %1320 = vmatprep.mubr.f32.mxu0 0.0
  %1321 = vmatmul.mubr.f32.gmra.mxu0 %v1144
  %v1322 = vpop.f32.mrf.mxu0
  %v1323 = vadd.f32 %v76, %v1322
  %v1324 = vpop.f32.mrf.mxu0
  %1325 = vmatprep.mubr.f32.mxu0 0.0
  %1326 = vmatmul.mubr.f32.gmra.mxu0 %v1145
  %v1327 = vpop.f32.mrf.mxu0
  %v1328 = vadd.f32 %v76, %v1327
  %v1329 = vpop.f32.mrf.mxu0
  %1330 = vmatprep.mubr.f32.mxu0 0.0
  %1331 = vmatmul.mubr.f32.gmra.mxu0 %v1146
  %v1332 = vpop.f32.mrf.mxu0
  %v1333 = vadd.f32 %v76, %v1332
  %v1334 = vpop.f32.mrf.mxu0
  %1335 = vmatprep.mubr.f32.mxu0 0.0
  %1336 = vmatmul.mubr.f32.gmra.mxu0 %v1147
  %v1337 = vpop.f32.mrf.mxu0
  %v1338 = vadd.f32 %v76, %v1337
  %v1339 = vpop.f32.mrf.mxu0
  %1340 = vmatprep.mubr.f32.mxu0 0.0
  %1341 = vmatmul.mubr.f32.gmra.mxu0 %v1148
  %v1342 = vpop.f32.mrf.mxu0
  %v1343 = vadd.f32 %v76, %v1342
  %v1344 = vpop.f32.mrf.mxu0
  %1345 = vmatprep.mubr.f32.mxu0 0.0
  %1346 = vmatmul.mubr.f32.gmra.mxu0 %v1149
  %v1347 = vpop.f32.mrf.mxu0
  %v1348 = vadd.f32 %v76, %v1347
  %v1349 = vpop.f32.mrf.mxu0
  %1350 = vmatprep.mubr.f32.mxu0 0.0
  %1351 = vmatmul.mubr.f32.gmra.mxu0 %v1150
  %v1352 = vpop.f32.mrf.mxu0
  %v1353 = vadd.f32 %v76, %v1352
  %v1354 = vpop.f32.mrf.mxu0
  %1355 = vmatprep.mubr.f32.mxu0 0.0
  %1356 = vmatmul.mubr.f32.gmra.mxu0 %v1151
  %v1357 = vpop.f32.mrf.mxu0
  %v1358 = vadd.f32 %v76, %v1357
  %v1359 = vpop.f32.mrf.mxu0
  %1360 = vmatprep.mubr.f32.mxu0 0.0
  %1361 = vmatmul.mubr.f32.gmra.mxu0 %v1152
  %v1362 = vpop.f32.mrf.mxu0
  %v1363 = vadd.f32 %v76, %v1362
  %v1364 = vpop.f32.mrf.mxu0
  %1365 = vmatprep.mubr.f32.mxu0 0.0
  %1366 = vmatmul.mubr.f32.gmra.mxu0 %v1153
  %v1367 = vpop.f32.mrf.mxu0
  %v1368 = vadd.f32 %v76, %v1367
  %v1369 = vpop.f32.mrf.mxu0
  %1370 = vmatprep.mubr.f32.mxu0 0.0
  %1371 = vmatmul.mubr.f32.gmra.mxu0 %v1154
  %v1372 = vpop.f32.mrf.mxu0
  %v1373 = vadd.f32 %v76, %v1372
  %v1374 = vpop.f32.mrf.mxu0
  %1375 = vmatprep.mubr.f32.mxu0 0.0
  %1376 = vmatmul.mubr.f32.gmra.mxu0 %v1155
  %v1377 = vpop.f32.mrf.mxu0
  %v1378 = vadd.f32 %v76, %v1377
  %v1379 = vpop.f32.mrf.mxu0
  %1380 = vdwg.mxu0
  %v1381 = vmax.f32 %v1223, 0.0
  %v1382 = vmax.f32 %v1228, 0.0
  %v1383 = vmax.f32 %v1233, 0.0
  %v1384 = vmax.f32 %v1238, 0.0
  %v1385 = vmax.f32 %v1243, 0.0
  %v1386 = vmax.f32 %v1248, 0.0
  %v1387 = vmax.f32 %v1253, 0.0
  %v1388 = vmax.f32 %v1258, 0.0
  %v1389 = vmax.f32 %v1263, 0.0
  %v1390 = vmax.f32 %v1268, 0.0
  %v1391 = vmax.f32 %v1273, 0.0
  %v1392 = vmax.f32 %v1278, 0.0
  %v1393 = vmax.f32 %v1283, 0.0
  %v1394 = vmax.f32 %v1288, 0.0
  %v1395 = vmax.f32 %v1293, 0.0
  %v1396 = vmax.f32 %v1298, 0.0
  %v1397 = vmax.f32 %v1303, 0.0
  %v1398 = vmax.f32 %v1308, 0.0
  %v1399 = vmax.f32 %v1313, 0.0
  %v1400 = vmax.f32 %v1318, 0.0
  %v1401 = vmax.f32 %v1323, 0.0
  %v1402 = vmax.f32 %v1328, 0.0
  %v1403 = vmax.f32 %v1333, 0.0
  %v1404 = vmax.f32 %v1338, 0.0
  %v1405 = vmax.f32 %v1343, 0.0
  %v1406 = vmax.f32 %v1348, 0.0
  %v1407 = vmax.f32 %v1353, 0.0
  %v1408 = vmax.f32 %v1358, 0.0
  %v1409 = vmax.f32 %v1363, 0.0
  %v1410 = vmax.f32 %v1368, 0.0
  %v1411 = vmax.f32 %v1373, 0.0
  %v1412 = vmax.f32 %v1378, 0.0
  %v1413 = vsel %vm335, %v1381, 0.0
  %v1414 = vsel %vm335, %v1382, 0.0
  %v1415 = vadd.f32 %v1413, %v1414
  %v1416 = vsel %vm335, %v1383, 0.0
  %v1417 = vadd.f32 %v1415, %v1416
  %v1418 = vsel %vm335, %v1384, 0.0
  %v1419 = vadd.f32 %v1417, %v1418
  %v1420 = vsel %vm335, %v1385, 0.0
  %v1421 = vadd.f32 %v1419, %v1420
  %v1422 = vsel %vm335, %v1386, 0.0
  %v1423 = vadd.f32 %v1421, %v1422
  %v1424 = vsel %vm335, %v1387, 0.0
  %v1425 = vadd.f32 %v1423, %v1424
  %v1426 = vsel %vm335, %v1388, 0.0
  %v1427 = vadd.f32 %v1425, %v1426
  %v1428 = vsel %vm335, %v1389, 0.0
  %v1429 = vadd.f32 %v1427, %v1428
  %v1430 = vsel %vm335, %v1390, 0.0
  %v1431 = vadd.f32 %v1429, %v1430
  %v1432 = vsel %vm335, %v1391, 0.0
  %v1433 = vadd.f32 %v1431, %v1432
  %v1434 = vsel %vm335, %v1392, 0.0
  %v1435 = vadd.f32 %v1433, %v1434
  %v1436 = vsel %vm335, %v1393, 0.0
  %v1437 = vadd.f32 %v1435, %v1436
  %v1438 = vsel %vm335, %v1394, 0.0
  %v1439 = vadd.f32 %v1437, %v1438
  %v1440 = vsel %vm335, %v1395, 0.0
  %v1441 = vadd.f32 %v1439, %v1440
  %v1442 = vsel %vm335, %v1396, 0.0
  %v1443 = vadd.f32 %v1441, %v1442
  %v1444 = vsel %vm335, %v1397, 0.0
  %v1445 = vadd.f32 %v1443, %v1444
  %v1446 = vsel %vm335, %v1398, 0.0
  %v1447 = vadd.f32 %v1445, %v1446
  %v1448 = vsel %vm335, %v1399, 0.0
  %v1449 = vadd.f32 %v1447, %v1448
  %v1450 = vsel %vm335, %v1400, 0.0
  %v1451 = vadd.f32 %v1449, %v1450
  %v1452 = vsel %vm335, %v1401, 0.0
  %v1453 = vadd.f32 %v1451, %v1452
  %v1454 = vsel %vm335, %v1402, 0.0
  %v1455 = vadd.f32 %v1453, %v1454
  %v1456 = vsel %vm335, %v1403, 0.0
  %v1457 = vadd.f32 %v1455, %v1456
  %v1458 = vsel %vm335, %v1404, 0.0
  %v1459 = vadd.f32 %v1457, %v1458
  %v1460 = vsel %vm335, %v1405, 0.0
  %v1461 = vadd.f32 %v1459, %v1460
  %v1462 = vsel %vm335, %v1406, 0.0
  %v1463 = vadd.f32 %v1461, %v1462
  %v1464 = vsel %vm335, %v1407, 0.0
  %v1465 = vadd.f32 %v1463, %v1464
  %v1466 = vsel %vm335, %v1408, 0.0
  %v1467 = vadd.f32 %v1465, %v1466
  %v1468 = vsel %vm335, %v1409, 0.0
  %v1469 = vadd.f32 %v1467, %v1468
  %v1470 = vsel %vm335, %v1410, 0.0
  %v1471 = vadd.f32 %v1469, %v1470
  %v1472 = vsel %vm335, %v1411, 0.0
  %v1473 = vadd.f32 %v1471, %v1472
  %v1474 = vsel %vm335, %v1412, 0.0
  %v1475 = vadd.f32 %v1473, %v1474
  %v1476 = vrot.slane %v1475, 4
  %v1477 = vadd.f32 %v1475, %v1476
  %v1478 = vrot.slane %v1477, 2
  %v1479 = vadd.f32 %v1477, %v1478
  %v1480 = vrot.slane %v1479, 1
  %v1481 = vadd.f32 %v1479, %v1480
  %v1482 = vmul.f32 %v1481, 0.00390625
  %vm1483 = vcmask 1040384
  %v1484 = vsel %vm1483, %v405, %v764
  %vm1485 = vcmask 1041408
  %v1486 = vsel %vm1485, %v1484, %v1123
  %vm1487 = vcmask 1042432
  %v1488 = vsel %vm1487, %v1486, %v1482
  %v1489 = vld [vmem:[%s3] sm:$0xff]
  %v1490 = vld [vmem:[%s3 + $0x8] sm:$0xff]
  %v1491 = vld [vmem:[%s3 + $0x10] sm:$0xff]
  %v1492 = vld [vmem:[%s3 + $0x18] sm:$0xff]
  %v1493 = vld [vmem:[%s4] sm:$0x1]
  %v1495 = vlaneseq
  %v1496 = vshrl.u32 %v1495, 7
  %v1497 = vsub.s32 0, %v1496
  %v1498 = vrot.slane %v1493, %v1497
  %v1501 = vsel %vm335, %v1488, 0
  %1503 = vmatprep.subr.mxu0 0.0
  %1504 = vmatpush1.msra.mxu0 0.0
  %1505 = vmatprep.subr.mxu0 0.0
  %1506 = vmatpush1.msra.mxu0 0.0
  %1507 = vmatprep.subr.mxu0 0.0
  %1508 = vmatpush1.msra.mxu0 0.0
  %1509 = vmatprep.subr.mxu0 0.0
  %1510 = vmatpush1.msra.mxu0 0.0
  %1511 = vmatprep.subr.mxu0 0.0
  %1512 = vmatpush1.msra.mxu0 0.0
  %1513 = vmatprep.subr.mxu0 0.0
  %1514 = vmatpush1.msra.mxu0 0.0
  %1515 = vmatprep.subr.mxu0 0.0
  %1516 = vmatpush1.msra.mxu0 0.0
  %1517 = vmatprep.subr.mxu0 0.0
  %1518 = vmatpush1.msra.mxu0 0.0
  %1519 = vmatprep.subr.mxu0 0.0
  %1520 = vmatpush1.msra.mxu0 0.0
  %1521 = vmatprep.subr.mxu0 0.0
  %1522 = vmatpush1.msra.mxu0 0.0
  %1523 = vmatprep.subr.mxu0 0.0
  %1524 = vmatpush1.msra.mxu0 0.0
  %1525 = vmatprep.subr.mxu0 0.0
  %1526 = vmatpush1.msra.mxu0 0.0
  %1527 = vmatprep.subr.mxu0 0.0
  %1528 = vmatpush1.msra.mxu0 %v1492
  %1529 = vmatprep.subr.mxu0 0.0
  %1530 = vmatpush1.msra.mxu0 %v1491
  %1531 = vmatprep.subr.mxu0 0.0
  %1532 = vmatpush1.msra.mxu0 %v1490
  %1533 = vmatprep.subr.mxu0 0.0
  %1534 = vmatpush1.msra.mxu0 %v1489
  %1535 = vmatprep.subr.mxu0 0.0
  %1536 = vmatpush2.msra.mxu0 0.0
  %1537 = vmatprep.subr.mxu0 0.0
  %1538 = vmatpush2.msra.mxu0 0.0
  %1539 = vmatprep.subr.mxu0 0.0
  %1540 = vmatpush2.msra.mxu0 0.0
  %1541 = vmatprep.subr.mxu0 0.0
  %1542 = vmatpush2.msra.mxu0 0.0
  %1543 = vmatprep.subr.mxu0 0.0
  %1544 = vmatpush2.msra.mxu0 0.0
  %1545 = vmatprep.subr.mxu0 0.0
  %1546 = vmatpush2.msra.mxu0 0.0
  %1547 = vmatprep.subr.mxu0 0.0
  %1548 = vmatpush2.msra.mxu0 0.0
  %1549 = vmatprep.subr.mxu0 0.0
  %1550 = vmatpush2.msra.mxu0 0.0
  %1551 = vmatprep.subr.mxu0 0.0
  %1552 = vmatpush2.msra.mxu0 0.0
  %1553 = vmatprep.subr.mxu0 0.0
  %1554 = vmatpush2.msra.mxu0 0.0
  %1555 = vmatprep.subr.mxu0 0.0
  %1556 = vmatpush2.msra.mxu0 0.0
  %1557 = vmatprep.subr.mxu0 0.0
  %1558 = vmatpush2.msra.mxu0 0.0
  %1559 = vmatprep.subr.mxu0 0.0
  %1560 = vmatpush2.msra.mxu0 0.0
  %1561 = vmatprep.subr.mxu0 0.0
  %1562 = vmatpush2.msra.mxu0 0.0
  %1563 = vmatprep.subr.mxu0 0.0
  %1564 = vmatpush2.msra.mxu0 0.0
  %1565 = vmatprep.subr.mxu0 0.0
  %1566 = vmatpush2.msra.mxu0 0.0
  %1567 = vmatprep.mubr.f32.mxu0 0.0
  %1568 = vmatmul.mubr.f32.gmra.mxu0 %v1501
  %v1569 = vpop.f32.mrf.mxu0
  %v1570 = vadd.f32 %v1498, %v1569
  %v1571 = vpop.f32.mrf.mxu0
  %1572 = vdwg.mxu0
  %v1573 = vmax.f32 %v1570, 0.0
  %v1574 = vld [vmem:[%s5] sm:$0xff]
  %v1575 = vld [vmem:[%s5 + $0x8] sm:$0xff]
  %v1576 = vld [vmem:[%s5 + $0x10] sm:$0xff]
  %v1577 = vld [vmem:[%s5 + $0x18] sm:$0xff]
  %v1579 = vsel %vm335, %v1573, 0
  %1581 = vmatprep.subr.mxu0 0.0
  %1582 = vmatpush1.msra.mxu0 0.0
  %1583 = vmatprep.subr.mxu0 0.0
  %1584 = vmatpush1.msra.mxu0 0.0
  %1585 = vmatprep.subr.mxu0 0.0
  %1586 = vmatpush1.msra.mxu0 0.0
  %1587 = vmatprep.subr.mxu0 0.0
  %1588 = vmatpush1.msra.mxu0 0.0
  %1589 = vmatprep.subr.mxu0 0.0
  %1590 = vmatpush1.msra.mxu0 0.0
  %1591 = vmatprep.subr.mxu0 0.0
  %1592 = vmatpush1.msra.mxu0 0.0
  %1593 = vmatprep.subr.mxu0 0.0
  %1594 = vmatpush1.msra.mxu0 0.0
  %1595 = vmatprep.subr.mxu0 0.0
  %1596 = vmatpush1.msra.mxu0 0.0
  %1597 = vmatprep.subr.mxu0 0.0
  %1598 = vmatpush1.msra.mxu0 0.0
  %1599 = vmatprep.subr.mxu0 0.0
  %1600 = vmatpush1.msra.mxu0 0.0
  %1601 = vmatprep.subr.mxu0 0.0
  %1602 = vmatpush1.msra.mxu0 0.0
  %1603 = vmatprep.subr.mxu0 0.0
  %1604 = vmatpush1.msra.mxu0 0.0
  %1605 = vmatprep.subr.mxu0 0.0
  %1606 = vmatpush1.msra.mxu0 %v1577
  %1607 = vmatprep.subr.mxu0 0.0
  %1608 = vmatpush1.msra.mxu0 %v1576
  %1609 = vmatprep.subr.mxu0 0.0
  %1610 = vmatpush1.msra.mxu0 %v1575
  %1611 = vmatprep.subr.mxu0 0.0
  %1612 = vmatpush1.msra.mxu0 %v1574
  %1613 = vmatprep.subr.mxu0 0.0
  %1614 = vmatpush2.msra.mxu0 0.0
  %1615 = vmatprep.subr.mxu0 0.0
  %1616 = vmatpush2.msra.mxu0 0.0
  %1617 = vmatprep.subr.mxu0 0.0
  %1618 = vmatpush2.msra.mxu0 0.0
  %1619 = vmatprep.subr.mxu0 0.0
  %1620 = vmatpush2.msra.mxu0 0.0
  %1621 = vmatprep.subr.mxu0 0.0
  %1622 = vmatpush2.msra.mxu0 0.0
  %1623 = vmatprep.subr.mxu0 0.0
  %1624 = vmatpush2.msra.mxu0 0.0
  %1625 = vmatprep.subr.mxu0 0.0
  %1626 = vmatpush2.msra.mxu0 0.0
  %1627 = vmatprep.subr.mxu0 0.0
  %1628 = vmatpush2.msra.mxu0 0.0
  %1629 = vmatprep.subr.mxu0 0.0
  %1630 = vmatpush2.msra.mxu0 0.0
  %1631 = vmatprep.subr.mxu0 0.0
  %1632 = vmatpush2.msra.mxu0 0.0
  %1633 = vmatprep.subr.mxu0 0.0
  %1634 = vmatpush2.msra.mxu0 0.0
  %1635 = vmatprep.subr.mxu0 0.0
  %1636 = vmatpush2.msra.mxu0 0.0
  %1637 = vmatprep.subr.mxu0 0.0
  %1638 = vmatpush2.msra.mxu0 0.0
  %1639 = vmatprep.subr.mxu0 0.0
  %1640 = vmatpush2.msra.mxu0 0.0
  %1641 = vmatprep.subr.mxu0 0.0
  %1642 = vmatpush2.msra.mxu0 0.0
  %1643 = vmatprep.subr.mxu0 0.0
  %1644 = vmatpush2.msra.mxu0 0.0
  %1645 = vmatprep.mubr.f32.mxu0 0.0
  %1646 = vmatmul.mubr.f32.gmra.mxu0 %v1579
  %v1647 = vpop.f32.mrf.mxu0
  %v1648 = vadd.f32 0.0, %v1647
  %v1649 = vpop.f32.mrf.mxu0
  %1650 = vdwg.mxu0
  %1652 = vrot.lane.b32.xlu0 %v1648, 32
  %v1653 = vpop.permute.xlu0 %1652
  %v1655 = vsel %vm335, %v1488, %v1653
  %1656 = vst [vmem:[%s6] sm:$0xf] %v1655
  // Predicated region
  $region26: #{simclr_forward.1} parent=0 // pred_check
    _
  $region27: #{simclr_forward.1} parent=0 // pred_check_branch
    %1658 = sbr.rel (0) target = $region29
  $region28: #{simclr_forward.1} parent=0 // pred_region
    _
  $region29: #{simclr_forward.1} parent=0 // pred_fallthru
    _
  // Predicated region
  $region30: #{simclr_forward.1} parent=0 // pred_check
    _
  $region31: #{simclr_forward.1} parent=0 // pred_check_branch
    %1660 = sbr.rel (0) target = $region33
  $region32: #{simclr_forward.1} parent=0 // pred_region
    _
  $region33: #{simclr_forward.1} parent=0 // pred_fallthru
    _

</llo_original>
